<compile_context>
chip_gen: v7x
topology: tpu7x:2x2x1
jax: 0.10.0
libtpu: 0.0.40
codegen_flags: <defaults>
</compile_context>

<pallas_src>
import functools

import jax
import jax.numpy as jnp
from jax.experimental import pallas as pl
from jax.experimental.pallas import tpu as pltpu


def _generator_kernel(xprev_ref, xcur_ref, xnext_ref, m1_ref, b1_ref, m2_ref,
                      b2_ref, out_ref, *, H, W, Cin, hidden, TH, compute_dtype):
    """One (image, row-band) step of the fused generator.

    xprev/xcur/xnext : (1, TH, W*Cin)       this band and its neighbours
    m1               : (3, (W+2)*Cin, W*hidden)   banded conv1 weights (per dy)
    b1               : (1, W*hidden)              conv1 bias tiled over w
    m2               : (3, (W+2)*hidden, W)       banded conv2 weights (per dy)
    b2               : (1, 1)
    out              : (1, 1, TH*W)               lane-dense output band
    """
    THp = TH + 2
    b = pl.program_id(1)

    # ---- assemble the (TH+4)-row input band; out-of-image rows -> 0 -------
    xprev = xprev_ref[0]                                   # (TH, W*Cin)
    xcur = xcur_ref[0]
    xnext = xnext_ref[0]
    rows = jnp.concatenate([xprev[TH - 2:], xcur, xnext[:2]], axis=0)
    g = jax.lax.broadcasted_iota(jnp.int32, (TH + 4, 1), 0) + (b * TH - 2)
    rows = jnp.where((g >= 0) & (g < H), rows, 0.0)
    zc = jnp.zeros((TH + 4, Cin), jnp.float32)             # 1-column zero halo
    xband = jnp.concatenate([zc, rows, zc], axis=1)        # (TH+4, (W+2)*Cin)

    # ---- conv1: banded-weight matmuls (one per dy), bias, ReLU -------------
    acc1 = jnp.zeros((THp, W * hidden), jnp.float32)
    for dy in range(3):
        lhs = xband[dy:dy + THp].astype(compute_dtype)     # (THp, (W+2)*Cin)
        acc1 = acc1 + jnp.dot(lhs, m1_ref[dy],
                              preferred_element_type=jnp.float32)
    h = jnp.maximum(acc1 + b1_ref[...], 0.0)               # (THp, W*hidden)

    # hidden halo rows outside the image are conv2's zero padding
    r = jax.lax.broadcasted_iota(jnp.int32, (THp, 1), 0) + (b * TH - 1)
    h = jnp.where((r >= 0) & (r < H), h, 0.0)
    zh = jnp.zeros((THp, hidden), jnp.float32)
    hpad = jnp.concatenate([zh, h, zh], axis=1)            # (THp, (W+2)*hidden)

    # ---- conv2 (1 output channel): banded-weight matmuls, bias, sigmoid ----
    acc2 = jnp.zeros((TH, W), jnp.float32)
    for dy in range(3):
        lhs = hpad[dy:dy + TH].astype(compute_dtype)       # (TH, (W+2)*hidden)
        acc2 = acc2 + jnp.dot(lhs, m2_ref[dy],
                              preferred_element_type=jnp.float32)
    y = jax.nn.sigmoid(acc2 + b2_ref[...])                 # (TH, W), f32

    # (TH, W) -> (1, TH*W) via supported lane concats, then ONE full-lane
    # unmasked store of the whole band.
    yflat = jnp.concatenate([y[t:t + 1, :] for t in range(TH)], axis=1)
    out_ref[...] = yflat.reshape(1, 1, TH * W).astype(out_ref.dtype)


def _pick_band_rows(H):
    for th in (64, 32, 16, 8):
        if H % th == 0:
            return th
    return H


def _banded_conv_weights(w1, w2, W, Cin, hidden):
    """Block-Toeplitz weight matrices so the 3x3 convs become plain matmuls.

    m1[dy, (w+dx)*Cin + c,    w*hidden + f] = w1[dy*3+dx, c, f]
    m2[dy, (w+dx)*hidden + f, w]            = w2[dy*3+dx, f]
    (In real use these depend only on the weights and W -> precompute once.)
    """
    ind = (jnp.arange(W + 2)[None, None, :] ==
           (jnp.arange(W)[None, :, None] + jnp.arange(3)[:, None, None]))
    ind = ind.astype(jnp.float32)                           # (dx, w, p)
    w1r = w1.reshape(3, 3, Cin, hidden)
    w2r = w2.reshape(3, 3, hidden)
    m1 = jnp.einsum('xwp,yxcf->ypcwf', ind, w1r).reshape(
        3, (W + 2) * Cin, W * hidden)
    m2 = jnp.einsum('xwp,yxf->ypfw', ind, w2r).reshape(
        3, (W + 2) * hidden, W)
    return m1, m2


def gan_model_forward(x_nchw, params, *, band_rows=None,
                      compute_dtype=jnp.float32):
    """GanModel.forward == generator(x).  x_nchw: (N, Cin, H, W) float32."""
    w1, b1, w2, b2 = params              # (9,Cin,hid), (1,hid), (9,hid), (1,1)
    N, Cin, H, W = x_nchw.shape
    hidden = w1.shape[2]

    TH = _pick_band_rows(H) if band_rows is None else band_rows
    if H % TH != 0 or TH < 2:
        raise ValueError(f"band_rows={TH} must divide H={H} and be >= 2")
    nb = H // TH

    # NCHW -> (N, H, W*Cin): one XLA transpose; the kernel sees a lane-dense
    # row layout and pads the 1-pixel halo itself.
    x_flat = jnp.transpose(x_nchw, (0, 2, 3, 1)).reshape(N, H, W * Cin)

    m1, m2 = _banded_conv_weights(w1, w2, W, Cin, hidden)
    m1 = m1.astype(compute_dtype)
    m2 = m2.astype(compute_dtype)
    b1_tiled = jnp.tile(b1.reshape(1, hidden), (1, W))      # (1, W*hidden)

    itemsize_w = jnp.dtype(compute_dtype).itemsize
    block_bytes = (3 * 2 * TH * W * Cin * 4                  # x views (2-buf)
                   + 2 * 3 * (W + 2) * Cin * W * hidden * itemsize_w   # m1
                   + 2 * 3 * (W + 2) * hidden * W * itemsize_w         # m2
                   + 2 * (W * hidden + 1) * 4                          # biases
                   + 2 * TH * W * 4)                                   # out
    value_bytes = ((TH + 4) * (W + 2) * Cin
                   + 2 * (TH + 2) * (W + 2) * hidden + 2 * TH * W) * 4
    try:
        vmem_cap = int(getattr(pltpu.get_tpu_info(), "vmem_capacity_bytes",
                               128 << 20))
    except Exception:
        vmem_cap = 128 << 20
    vmem_limit = int(min(max(8 << 20, 4 * (block_bytes + value_bytes)),
                         vmem_cap // 2))

    cost = pl.CostEstimate(
        flops=int(N * H * W * (2 * 9 * Cin * hidden + 2 * 9 * hidden + 4)),
        transcendentals=int(N * H * W),
        bytes_accessed=int(4 * (x_flat.size + N * H * W + W * hidden + 1)
                           + itemsize_w * (m1.size + m2.size)),
    )

    kernel = functools.partial(_generator_kernel, H=H, W=W, Cin=Cin,
                               hidden=hidden, TH=TH,
                               compute_dtype=compute_dtype)

    wc = W * Cin
    x_prev_spec = pl.BlockSpec((1, TH, wc),
                               lambda n, b: (n, jnp.maximum(b - 1, 0), 0))
    x_cur_spec = pl.BlockSpec((1, TH, wc), lambda n, b: (n, b, 0))
    x_next_spec = pl.BlockSpec((1, TH, wc),
                               lambda n, b: (n, jnp.minimum(b + 1, nb - 1), 0))

    out_flat = pl.pallas_call(
        kernel,
        out_shape=jax.ShapeDtypeStruct((N * nb, 1, TH * W), jnp.float32),
        grid_spec=pltpu.PrefetchScalarGridSpec(
            num_scalar_prefetch=0,
            grid=(N, nb),
            in_specs=[
                x_prev_spec, x_cur_spec, x_next_spec,
                pl.BlockSpec((3, (W + 2) * Cin, W * hidden),
                             lambda n, b: (0, 0, 0)),                 # m1
                pl.BlockSpec((1, W * hidden), lambda n, b: (0, 0)),   # b1
                pl.BlockSpec((3, (W + 2) * hidden, W),
                             lambda n, b: (0, 0, 0)),                 # m2
                pl.BlockSpec((1, 1), lambda n, b: (0, 0)),            # b2
            ],
            out_specs=pl.BlockSpec((1, 1, TH * W),
                                   lambda n, b: (n * nb + b, 0, 0)),
        ),
        compiler_params=pltpu.CompilerParams(
            dimension_semantics=("parallel", "parallel"),
            vmem_limit_bytes=vmem_limit,
        ),
        cost_estimate=cost,
    )(x_flat, x_flat, x_flat, m1, b1_tiled, m2, b2)

    # (N*nb, 1, TH*W) -> (N, 1, H, W): a free, order-preserving reshape.
    return out_flat.reshape(N, 1, H, W)


def _reference_forward(x_nchw, params):
    """Pure-JAX reference of the same generator for the correctness check."""
    w1, b1, w2, b2 = params
    N, Cin, H, W = x_nchw.shape
    hidden = w1.shape[2]
    x = jnp.transpose(x_nchw, (0, 2, 3, 1))
    xp = jnp.pad(x, ((0, 0), (1, 1), (1, 1), (0, 0)))
    acc1 = jnp.zeros((N, H, W, hidden), jnp.float32)
    for k in range(9):
        dy, dx = k // 3, k % 3
        acc1 = acc1 + jnp.einsum('nhwc,cf->nhwf',
                                 xp[:, dy:dy + H, dx:dx + W, :], w1[k])
    h = jnp.maximum(acc1 + b1.reshape(1, 1, 1, hidden), 0.0)
    hp = jnp.pad(h, ((0, 0), (1, 1), (1, 1), (0, 0)))
    acc2 = jnp.zeros((N, H, W), jnp.float32)
    for k in range(9):
        dy, dx = k // 3, k % 3
        acc2 = acc2 + jnp.einsum('nhwc,c->nhw',
                                 hp[:, dy:dy + H, dx:dx + W, :], w2[k])
    y = jax.nn.sigmoid(acc2 + b2[0, 0])
    return y.reshape(N, 1, H, W)


def init_params(key, cin, hidden):
    k1, k2, k3, k4 = jax.random.split(key, 4)
    w1 = 0.1 * jax.random.normal(k1, (9, cin, hidden), jnp.float32)
    b1 = 0.1 * jax.random.normal(k2, (1, hidden), jnp.float32)
    w2 = 0.1 * jax.random.normal(k3, (9, hidden), jnp.float32)
    b2 = 0.1 * jax.random.normal(k4, (1, 1), jnp.float32)
    return (w1, b1, w2, b2)


if __name__ == "__main__":
    key = jax.random.PRNGKey(0)
    kx, kp = jax.random.split(key)

    N, Cin, H, W, hidden = 2, 4, 16, 16, 32
    x = jax.random.normal(kx, (N, Cin, H, W), jnp.float32)
    params = init_params(kp, Cin, hidden)
    ref = _reference_forward(x, params)

    # Default path: f32 MXU operands, auto band height (H=16 -> one band).
    out = jax.block_until_ready(jax.jit(gan_model_forward)(x, params))
    assert out.shape == (N, 1, H, W)
    assert jnp.allclose(out, ref, atol=2e-5, rtol=1e-4), "f32 path mismatch"

    # Explicitly banded path (two 8-row bands) exercises the halo exchange.
    out_b = jax.block_until_ready(
        jax.jit(lambda xx, pp: gan_model_forward(xx, pp, band_rows=8))(
            x, params))
    assert jnp.allclose(out_b, ref, atol=2e-5, rtol=1e-4), "banded mismatch"

    # bf16 MXU operands (v6e/v7x win), f32 accumulation + f32 VPU epilogue.
    out_bf16 = jax.block_until_ready(
        jax.jit(lambda xx, pp: gan_model_forward(
            xx, pp, band_rows=8, compute_dtype=jnp.bfloat16))(x, params))
    assert jnp.allclose(out_bf16, ref, atol=2e-2, rtol=2e-2), "bf16 mismatch"

    print("KERNEL_OK")
</pallas_src>

<mosaic_0001>
module attributes {stable_mosaic.version = 11 : i64} {
  func.func @_generator_kernel(%arg0: i32, %arg1: i32, %arg2: memref<1x16x64xf32, #tpu.memory_space<vmem>>, %arg3: memref<1x16x64xf32, #tpu.memory_space<vmem>>, %arg4: memref<1x16x64xf32, #tpu.memory_space<vmem>>, %arg5: memref<3x72x512xf32, #tpu.memory_space<vmem>>, %arg6: memref<1x512xf32, #tpu.memory_space<vmem>>, %arg7: memref<3x576x16xf32, #tpu.memory_space<vmem>>, %arg8: memref<1x1xf32, #tpu.memory_space<vmem>>, %arg9: memref<1x1x256xf32, #tpu.memory_space<vmem>>) attributes {dimension_semantics = [#tpu.dimension_semantics<parallel>, #tpu.dimension_semantics<parallel>], iteration_bounds = array<i64: 2, 1>, scalar_prefetch = 0 : i64, scratch_operands = 0 : i64, tpu.core_type = #tpu.core_type<tc>, window_params = [{transform_indices = @transform_0, window_bounds = array<i64: 1, 16, 64>}, {transform_indices = @transform_1, window_bounds = array<i64: 1, 16, 64>}, {transform_indices = @transform_2, window_bounds = array<i64: 1, 16, 64>}, {pipeline_mode = #tpu.pipeline_mode<synchronous>, transform_indices = @transform_3, window_bounds = array<i64: 3, 72, 512>}, {pipeline_mode = #tpu.pipeline_mode<synchronous>, transform_indices = @transform_4, window_bounds = array<i64: 1, 512>}, {pipeline_mode = #tpu.pipeline_mode<synchronous>, transform_indices = @transform_5, window_bounds = array<i64: 3, 576, 16>}, {pipeline_mode = #tpu.pipeline_mode<synchronous>, transform_indices = @transform_6, window_bounds = array<i64: 1, 1>}, {transform_indices = @transform_7, window_bounds = array<i64: 1, 1, 256>}]} {
    %c0 = arith.constant 0 : index
    %c0_0 = arith.constant 0 : index
    %c0_1 = arith.constant 0 : index
    %0 = vector.load %arg2[%c0, %c0_0, %c0_1] : memref<1x16x64xf32, #tpu.memory_space<vmem>>, vector<1x16x64xf32>
    %1 = vector.shape_cast %0 : vector<1x16x64xf32> to vector<16x64xf32>
    %c0_2 = arith.constant 0 : index
    %c0_3 = arith.constant 0 : index
    %c0_4 = arith.constant 0 : index
    %2 = vector.load %arg3[%c0_2, %c0_3, %c0_4] : memref<1x16x64xf32, #tpu.memory_space<vmem>>, vector<1x16x64xf32>
    %3 = vector.shape_cast %2 : vector<1x16x64xf32> to vector<16x64xf32>
    %c0_5 = arith.constant 0 : index
    %c0_6 = arith.constant 0 : index
    %c0_7 = arith.constant 0 : index
    %4 = vector.load %arg4[%c0_5, %c0_6, %c0_7] : memref<1x16x64xf32, #tpu.memory_space<vmem>>, vector<1x16x64xf32>
    %5 = vector.shape_cast %4 : vector<1x16x64xf32> to vector<16x64xf32>
    %6 = vector.extract_strided_slice %1 {offsets = [14, 0], sizes = [2, 64], strides = [1, 1]} : vector<16x64xf32> to vector<2x64xf32>
    %7 = vector.extract_strided_slice %5 {offsets = [0, 0], sizes = [2, 64], strides = [1, 1]} : vector<16x64xf32> to vector<2x64xf32>
    %8 = tpu.concatenate %6, %3, %7 in 0 : vector<2x64xf32>, vector<16x64xf32>, vector<2x64xf32> -> vector<20x64xf32>
    %9 = tpu.iota {dimensions = array<i32: 0>} : vector<20x1xi32>
    %c16_i32 = arith.constant 16 : i32
    %10 = arith.muli %arg1, %c16_i32 : i32
    %c2_i32 = arith.constant 2 : i32
    %11 = arith.subi %10, %c2_i32 : i32
    %12 = vector.broadcast %11 : i32 to vector<20x1xi32>
    %13 = arith.addi %9, %12 : vector<20x1xi32>
    %c0_i32 = arith.constant 0 : i32
    %14 = vector.broadcast %c0_i32 : i32 to vector<20x1xi32>
    %15 = arith.cmpi sge, %13, %14 : vector<20x1xi32>
    %c16_i32_8 = arith.constant 16 : i32
    %16 = vector.broadcast %c16_i32_8 : i32 to vector<20x1xi32>
    %17 = arith.cmpi slt, %13, %16 : vector<20x1xi32>
    %18 = arith.andi %15, %17 : vector<20x1xi1>
    %cst = arith.constant 0.000000e+00 : f32
    %19 = vector.shape_cast %18 : vector<20x1xi1> to vector<20x1xi1>
    %20 = vector.broadcast %19 : vector<20x1xi1> to vector<20x64xi1>
    %21 = vector.broadcast %cst : f32 to vector<20x64xf32>
    %22 = arith.select %20, %8, %21 : vector<20x64xi1>, vector<20x64xf32>
    %cst_9 = arith.constant 0.000000e+00 : f32
    %23 = vector.broadcast %cst_9 : f32 to vector<20x4xf32>
    %24 = tpu.concatenate %23, %22, %23 in 1 : vector<20x4xf32>, vector<20x64xf32>, vector<20x4xf32> -> vector<20x72xf32>
    %cst_10 = arith.constant 0.000000e+00 : f32
    %25 = vector.broadcast %cst_10 : f32 to vector<18x512xf32>
    %26 = vector.extract_strided_slice %24 {offsets = [0, 0], sizes = [18, 72], strides = [1, 1]} : vector<20x72xf32> to vector<18x72xf32>
    %c0_11 = arith.constant 0 : index
    %c0_12 = arith.constant 0 : index
    %c0_13 = arith.constant 0 : index
    %27 = vector.load %arg5[%c0_11, %c0_12, %c0_13] : memref<3x72x512xf32, #tpu.memory_space<vmem>>, vector<1x72x512xf32>
    %28 = vector.shape_cast %27 : vector<1x72x512xf32> to vector<72x512xf32>
    %cst_14 = arith.constant dense<0.000000e+00> : vector<18x512xf32>
    %29 = tpu.matmul %26, %28, %cst_14 {dimension_numbers = #tpu.dot_dimension_numbers<[1], [0], [0], [1], [0, 0, 1, 1], [], []>} : vector<18x72xf32>, vector<72x512xf32>, vector<18x512xf32> -> vector<18x512xf32>
    %30 = arith.addf %25, %29 : vector<18x512xf32>
    %31 = vector.extract_strided_slice %24 {offsets = [1, 0], sizes = [18, 72], strides = [1, 1]} : vector<20x72xf32> to vector<18x72xf32>
    %c1 = arith.constant 1 : index
    %c0_15 = arith.constant 0 : index
    %c0_16 = arith.constant 0 : index
    %32 = vector.load %arg5[%c1, %c0_15, %c0_16] : memref<3x72x512xf32, #tpu.memory_space<vmem>>, vector<1x72x512xf32>
    %33 = vector.shape_cast %32 : vector<1x72x512xf32> to vector<72x512xf32>
    %cst_17 = arith.constant dense<0.000000e+00> : vector<18x512xf32>
    %34 = tpu.matmul %31, %33, %cst_17 {dimension_numbers = #tpu.dot_dimension_numbers<[1], [0], [0], [1], [0, 0, 1, 1], [], []>} : vector<18x72xf32>, vector<72x512xf32>, vector<18x512xf32> -> vector<18x512xf32>
    %35 = arith.addf %30, %34 : vector<18x512xf32>
    %36 = vector.extract_strided_slice %24 {offsets = [2, 0], sizes = [18, 72], strides = [1, 1]} : vector<20x72xf32> to vector<18x72xf32>
    %c2 = arith.constant 2 : index
    %c0_18 = arith.constant 0 : index
    %c0_19 = arith.constant 0 : index
    %37 = vector.load %arg5[%c2, %c0_18, %c0_19] : memref<3x72x512xf32, #tpu.memory_space<vmem>>, vector<1x72x512xf32>
    %38 = vector.shape_cast %37 : vector<1x72x512xf32> to vector<72x512xf32>
    %cst_20 = arith.constant dense<0.000000e+00> : vector<18x512xf32>
    %39 = tpu.matmul %36, %38, %cst_20 {dimension_numbers = #tpu.dot_dimension_numbers<[1], [0], [0], [1], [0, 0, 1, 1], [], []>} : vector<18x72xf32>, vector<72x512xf32>, vector<18x512xf32> -> vector<18x512xf32>
    %40 = arith.addf %35, %39 : vector<18x512xf32>
    %c0_21 = arith.constant 0 : index
    %c0_22 = arith.constant 0 : index
    %41 = vector.load %arg6[%c0_21, %c0_22] : memref<1x512xf32, #tpu.memory_space<vmem>>, vector<1x512xf32>
    %42 = vector.broadcast %41 : vector<1x512xf32> to vector<18x512xf32>
    %43 = arith.addf %40, %42 : vector<18x512xf32>
    %cst_23 = arith.constant 0.000000e+00 : f32
    %44 = vector.broadcast %cst_23 : f32 to vector<18x512xf32>
    %45 = arith.maximumf %43, %44 : vector<18x512xf32>
    %46 = tpu.iota {dimensions = array<i32: 0>} : vector<18x1xi32>
    %c16_i32_24 = arith.constant 16 : i32
    %47 = arith.muli %arg1, %c16_i32_24 : i32
    %c1_i32 = arith.constant 1 : i32
    %48 = arith.subi %47, %c1_i32 : i32
    %49 = vector.broadcast %48 : i32 to vector<18x1xi32>
    %50 = arith.addi %46, %49 : vector<18x1xi32>
    %c0_i32_25 = arith.constant 0 : i32
    %51 = vector.broadcast %c0_i32_25 : i32 to vector<18x1xi32>
    %52 = arith.cmpi sge, %50, %51 : vector<18x1xi32>
    %c16_i32_26 = arith.constant 16 : i32
    %53 = vector.broadcast %c16_i32_26 : i32 to vector<18x1xi32>
    %54 = arith.cmpi slt, %50, %53 : vector<18x1xi32>
    %55 = arith.andi %52, %54 : vector<18x1xi1>
    %cst_27 = arith.constant 0.000000e+00 : f32
    %56 = vector.shape_cast %55 : vector<18x1xi1> to vector<18x1xi1>
    %57 = vector.broadcast %56 : vector<18x1xi1> to vector<18x512xi1>
    %58 = vector.broadcast %cst_27 : f32 to vector<18x512xf32>
    %59 = arith.select %57, %45, %58 : vector<18x512xi1>, vector<18x512xf32>
    %cst_28 = arith.constant 0.000000e+00 : f32
    %60 = vector.broadcast %cst_28 : f32 to vector<18x32xf32>
    %61 = tpu.concatenate %60, %59, %60 in 1 : vector<18x32xf32>, vector<18x512xf32>, vector<18x32xf32> -> vector<18x576xf32>
    %cst_29 = arith.constant 0.000000e+00 : f32
    %62 = vector.broadcast %cst_29 : f32 to vector<16x16xf32>
    %63 = vector.extract_strided_slice %61 {offsets = [0, 0], sizes = [16, 576], strides = [1, 1]} : vector<18x576xf32> to vector<16x576xf32>
    %c0_30 = arith.constant 0 : index
    %c0_31 = arith.constant 0 : index
    %c0_32 = arith.constant 0 : index
    %64 = vector.load %arg7[%c0_30, %c0_31, %c0_32] : memref<3x576x16xf32, #tpu.memory_space<vmem>>, vector<1x576x16xf32>
    %65 = vector.shape_cast %64 : vector<1x576x16xf32> to vector<576x16xf32>
    %cst_33 = arith.constant dense<0.000000e+00> : vector<16x16xf32>
    %66 = tpu.matmul %63, %65, %cst_33 {dimension_numbers = #tpu.dot_dimension_numbers<[1], [0], [0], [1], [0, 0, 1, 1], [], []>} : vector<16x576xf32>, vector<576x16xf32>, vector<16x16xf32> -> vector<16x16xf32>
    %67 = arith.addf %62, %66 : vector<16x16xf32>
    %68 = vector.extract_strided_slice %61 {offsets = [1, 0], sizes = [16, 576], strides = [1, 1]} : vector<18x576xf32> to vector<16x576xf32>
    %c1_34 = arith.constant 1 : index
    %c0_35 = arith.constant 0 : index
    %c0_36 = arith.constant 0 : index
    %69 = vector.load %arg7[%c1_34, %c0_35, %c0_36] : memref<3x576x16xf32, #tpu.memory_space<vmem>>, vector<1x576x16xf32>
    %70 = vector.shape_cast %69 : vector<1x576x16xf32> to vector<576x16xf32>
    %cst_37 = arith.constant dense<0.000000e+00> : vector<16x16xf32>
    %71 = tpu.matmul %68, %70, %cst_37 {dimension_numbers = #tpu.dot_dimension_numbers<[1], [0], [0], [1], [0, 0, 1, 1], [], []>} : vector<16x576xf32>, vector<576x16xf32>, vector<16x16xf32> -> vector<16x16xf32>
    %72 = arith.addf %67, %71 : vector<16x16xf32>
    %73 = vector.extract_strided_slice %61 {offsets = [2, 0], sizes = [16, 576], strides = [1, 1]} : vector<18x576xf32> to vector<16x576xf32>
    %c2_38 = arith.constant 2 : index
    %c0_39 = arith.constant 0 : index
    %c0_40 = arith.constant 0 : index
    %74 = vector.load %arg7[%c2_38, %c0_39, %c0_40] : memref<3x576x16xf32, #tpu.memory_space<vmem>>, vector<1x576x16xf32>
    %75 = vector.shape_cast %74 : vector<1x576x16xf32> to vector<576x16xf32>
    %cst_41 = arith.constant dense<0.000000e+00> : vector<16x16xf32>
    %76 = tpu.matmul %73, %75, %cst_41 {dimension_numbers = #tpu.dot_dimension_numbers<[1], [0], [0], [1], [0, 0, 1, 1], [], []>} : vector<16x576xf32>, vector<576x16xf32>, vector<16x16xf32> -> vector<16x16xf32>
    %77 = arith.addf %72, %76 : vector<16x16xf32>
    %c0_42 = arith.constant 0 : index
    %c0_43 = arith.constant 0 : index
    %78 = vector.load %arg8[%c0_42, %c0_43] : memref<1x1xf32, #tpu.memory_space<vmem>>, vector<1x1xf32>
    %79 = vector.broadcast %78 : vector<1x1xf32> to vector<16x16xf32>
    %80 = arith.addf %77, %79 : vector<16x16xf32>
    %81 = arith.negf %80 : vector<16x16xf32>
    %82 = math.exp %81 : vector<16x16xf32>
    %cst_44 = arith.constant 1.000000e+00 : f32
    %83 = vector.broadcast %cst_44 : f32 to vector<16x16xf32>
    %84 = arith.addf %83, %82 : vector<16x16xf32>
    %85 = arith.divf %83, %84 : vector<16x16xf32>
    %86 = vector.extract_strided_slice %85 {offsets = [0, 0], sizes = [1, 16], strides = [1, 1]} : vector<16x16xf32> to vector<1x16xf32>
    %87 = vector.extract_strided_slice %85 {offsets = [1, 0], sizes = [1, 16], strides = [1, 1]} : vector<16x16xf32> to vector<1x16xf32>
    %88 = vector.extract_strided_slice %85 {offsets = [2, 0], sizes = [1, 16], strides = [1, 1]} : vector<16x16xf32> to vector<1x16xf32>
    %89 = vector.extract_strided_slice %85 {offsets = [3, 0], sizes = [1, 16], strides = [1, 1]} : vector<16x16xf32> to vector<1x16xf32>
    %90 = vector.extract_strided_slice %85 {offsets = [4, 0], sizes = [1, 16], strides = [1, 1]} : vector<16x16xf32> to vector<1x16xf32>
    %91 = vector.extract_strided_slice %85 {offsets = [5, 0], sizes = [1, 16], strides = [1, 1]} : vector<16x16xf32> to vector<1x16xf32>
    %92 = vector.extract_strided_slice %85 {offsets = [6, 0], sizes = [1, 16], strides = [1, 1]} : vector<16x16xf32> to vector<1x16xf32>
    %93 = vector.extract_strided_slice %85 {offsets = [7, 0], sizes = [1, 16], strides = [1, 1]} : vector<16x16xf32> to vector<1x16xf32>
    %94 = vector.extract_strided_slice %85 {offsets = [8, 0], sizes = [1, 16], strides = [1, 1]} : vector<16x16xf32> to vector<1x16xf32>
    %95 = vector.extract_strided_slice %85 {offsets = [9, 0], sizes = [1, 16], strides = [1, 1]} : vector<16x16xf32> to vector<1x16xf32>
    %96 = vector.extract_strided_slice %85 {offsets = [10, 0], sizes = [1, 16], strides = [1, 1]} : vector<16x16xf32> to vector<1x16xf32>
    %97 = vector.extract_strided_slice %85 {offsets = [11, 0], sizes = [1, 16], strides = [1, 1]} : vector<16x16xf32> to vector<1x16xf32>
    %98 = vector.extract_strided_slice %85 {offsets = [12, 0], sizes = [1, 16], strides = [1, 1]} : vector<16x16xf32> to vector<1x16xf32>
    %99 = vector.extract_strided_slice %85 {offsets = [13, 0], sizes = [1, 16], strides = [1, 1]} : vector<16x16xf32> to vector<1x16xf32>
    %100 = vector.extract_strided_slice %85 {offsets = [14, 0], sizes = [1, 16], strides = [1, 1]} : vector<16x16xf32> to vector<1x16xf32>
    %101 = vector.extract_strided_slice %85 {offsets = [15, 0], sizes = [1, 16], strides = [1, 1]} : vector<16x16xf32> to vector<1x16xf32>
    %102 = tpu.concatenate %86, %87, %88, %89, %90, %91, %92, %93, %94, %95, %96, %97, %98, %99, %100, %101 in 1 : vector<1x16xf32>, vector<1x16xf32>, vector<1x16xf32>, vector<1x16xf32>, vector<1x16xf32>, vector<1x16xf32>, vector<1x16xf32>, vector<1x16xf32>, vector<1x16xf32>, vector<1x16xf32>, vector<1x16xf32>, vector<1x16xf32>, vector<1x16xf32>, vector<1x16xf32>, vector<1x16xf32>, vector<1x16xf32> -> vector<1x256xf32>
    %103 = vector.shape_cast %102 : vector<1x256xf32> to vector<1x1x256xf32>
    %c0_45 = arith.constant 0 : index
    %c0_46 = arith.constant 0 : index
    %c0_47 = arith.constant 0 : index
    %104 = vector.load %arg9[%c0_45, %c0_46, %c0_47] : memref<1x1x256xf32, #tpu.memory_space<vmem>>, vector<1x1x256xf32>
    tpu.vector_store %arg9[%c0_45, %c0_46, %c0_47], %103 {strides = array<i32>} : memref<1x1x256xf32, #tpu.memory_space<vmem>>, vector<1x1x256xf32>,
    return
  }
  func.func @transform_0(%arg0: i32, %arg1: i32) -> (i32, i32, i32) {
    %c1_i32 = arith.constant 1 : i32
    %0 = arith.subi %arg1, %c1_i32 : i32
    %c0_i32 = arith.constant 0 : i32
    %1 = arith.maxsi %0, %c0_i32 : i32
    %c0_i32_0 = arith.constant 0 : i32
    %c0_i32_1 = arith.constant 0 : i32
    return %arg0, %1, %c0_i32_0 : i32, i32, i32
  }
  func.func @transform_1(%arg0: i32, %arg1: i32) -> (i32, i32, i32) {
    %c0_i32 = arith.constant 0 : i32
    %c0_i32_0 = arith.constant 0 : i32
    return %arg0, %arg1, %c0_i32 : i32, i32, i32
  }
  func.func @transform_2(%arg0: i32, %arg1: i32) -> (i32, i32, i32) {
    %c1_i32 = arith.constant 1 : i32
    %0 = arith.addi %arg1, %c1_i32 : i32
    %c0_i32 = arith.constant 0 : i32
    %1 = arith.minsi %0, %c0_i32 : i32
    %c0_i32_0 = arith.constant 0 : i32
    %c0_i32_1 = arith.constant 0 : i32
    return %arg0, %1, %c0_i32_0 : i32, i32, i32
  }
  func.func @transform_3(%arg0: i32, %arg1: i32) -> (i32, i32, i32) {
    %c0_i32 = arith.constant 0 : i32
    %c0_i32_0 = arith.constant 0 : i32
    %c0_i32_1 = arith.constant 0 : i32
    %c0_i32_2 = arith.constant 0 : i32
    return %c0_i32, %c0_i32_0, %c0_i32_1 : i32, i32, i32
  }
  func.func @transform_4(%arg0: i32, %arg1: i32) -> (i32, i32) {
    %c0_i32 = arith.constant 0 : i32
    %c0_i32_0 = arith.constant 0 : i32
    %c0_i32_1 = arith.constant 0 : i32
    return %c0_i32, %c0_i32_0 : i32, i32
  }
  func.func @transform_5(%arg0: i32, %arg1: i32) -> (i32, i32, i32) {
    %c0_i32 = arith.constant 0 : i32
    %c0_i32_0 = arith.constant 0 : i32
    %c0_i32_1 = arith.constant 0 : i32
    %c0_i32_2 = arith.constant 0 : i32
    return %c0_i32, %c0_i32_0, %c0_i32_1 : i32, i32, i32
  }
  func.func @transform_6(%arg0: i32, %arg1: i32) -> (i32, i32) {
    %c0_i32 = arith.constant 0 : i32
    %c0_i32_0 = arith.constant 0 : i32
    %c0_i32_1 = arith.constant 0 : i32
    return %c0_i32, %c0_i32_0 : i32, i32
  }
  func.func @transform_7(%arg0: i32, %arg1: i32) -> (i32, i32, i32) {
    %c1_i32 = arith.constant 1 : i32
    %0 = arith.muli %arg0, %c1_i32 : i32
    %1 = arith.addi %0, %arg1 : i32
    %c0_i32 = arith.constant 0 : i32
    %c0_i32_0 = arith.constant 0 : i32
    %c0_i32_1 = arith.constant 0 : i32
    return %1, %c0_i32, %c0_i32_0 : i32, i32, i32
  }
}

</mosaic_0001>

<llo_original>
// kernel: gan_model_forward.1
$region0: #{gan_model_forward.1}
  #allocation0 [shape = 'u32[]', space=smem, size = 0x4, offset = 0x4, fixed_abs, tag = 'smem constant byte address 0x4 - core index']
  #allocation1 [shape = 'u32[144,128]{1,0:T(1,128)}', space=vmem, size = 0x12000, scoped, tag = 'internal scratch']
  #allocation2 [shape = 'f32[1,1]{1,0:T(1,128)S(1)}', space=vmem, size = 0x200, scoped, tag = 'scoped memory for gan_model_forward.1']
  %s0 = inlined_call_operand.vmem [shape: f32[2,16,64], index: 0, kind: input, shape index: {}, may-alias: {0,1,2}]
  %s1 = inlined_call_operand.vmem [shape: f32[2,16,64], index: 1, kind: input, shape index: {}, may-alias: {0,1,2}]
  %s2 = inlined_call_operand.vmem [shape: f32[2,16,64], index: 2, kind: input, shape index: {}, may-alias: {0,1,2}]
  %s3 = inlined_call_operand.vmem [shape: f32[3,72,512], index: 3, kind: input, shape index: {}]
  %s4 = inlined_call_operand.vmem [shape: f32[1,512], index: 4, kind: input, shape index: {}]
  %s5 = inlined_call_operand.vmem [shape: f32[3,576,16], index: 5, kind: input, shape index: {}]
  %s6 = inlined_call_operand.<no memory space> [shape: f32[1,1], index: 6, kind: input, shape index: {}]
  %s7 = inlined_call_operand.vmem [shape: f32[2,1,256], index: 7, kind: output, shape index: {}]
  %s8 = sld [smem:[#allocation0]]
  $region61: #{gan_model_forward.1} parent=0
    _
  %s10 = ssub.s32 1, %s8
  %s11 = scalar_select 0, %s10, %s8
  %v12 = vstv %s6
  %13 = vst [vmem:[#allocation2] sm:$0x1] %v12
  loop: start=0, step=1, limit=4
  $region2: #{gan_model_forward.1} parent=0 // loop_pre_header
    _
  $region3: #{gan_model_forward.1} parent=0 // loop_header
    %s15 = sphi 0, %s19
    %p16 = scmp.ge.s32.totalorder %s15, 4
    %s22 = sphi 0, %s34
    %s23 = sphi 0, %s30
    %s24 = sphi 0, %s22
    %s25 = sphi 0, %s23
    %s26 = sphi 0, %s24
    %s27 = sphi 0, %s25
    %s45 = sphi 0, %s47
    %s48 = sphi 0, %s45
    %s49 = sphi 0, %s48
    %s65 = sphi 0, %s49
    %s73 = sphi 0, %s75
    %s76 = sphi 0, %s73
    %s77 = sphi 0, %s76
    %s93 = sphi 0, %s77
    %s107 = sphi 0, %s109
    %s110 = sphi 0, %s107
    %s111 = sphi 0, %s110
    %s127 = sphi 0, %s111
    %s131 = sphi 0, %s131
    %s133 = sphi 0, %s131
    %s134 = sphi 0, %s133
    %s148 = sphi 0, %s134
    %s152 = sphi 0, %s152
    %s154 = sphi 0, %s152
    %s155 = sphi 0, %s154
    %s169 = sphi 0, %s155
    %s173 = sphi 0, %s173
    %s175 = sphi 0, %s173
    %s176 = sphi 0, %s175
    %s190 = sphi 0, %s176
    %s194 = sphi 0, %s194
    %s196 = sphi 0, %s194
    %s197 = sphi 0, %s196
    %s211 = sphi 0, %s197
    %s219 = sphi 0, %s221
    %s222 = sphi 0, %s219
    %s223 = sphi 0, %s222
    %s239 = sphi 0, %s223
  $region4: #{gan_model_forward.1} parent=0 // loop_header_branch
    %18 = sbr.rel (%p16) target = $region8
  $region5: #{gan_model_forward.1} parent=0 // loop_body
    %s20 = ssub.s32 %s15, 1
    %s21 = ssub.s32 %s15, 2
    %s28 = sadd.s32 1, %s23
    %p29 = scmp.ge.s32.totalorder %s28, 1
    %s30 = scalar_select %p29, 0, %s28
    %s31 = sadd.s32 1, %s22
    %s32 = scalar_select %p29, %s31, %s22
    %p33 = scmp.ge.s32.totalorder %s32, 2
    %s34 = scalar_select %p33, 0, %s32
    %s35 = ssub.s32 %s23, 1
    %p36 = scmp.gt.s32.totalorder %s35, 0
    %s37 = scalar_select %p36, %s35, 0
    %s38 = ssub.s32 %s30, 1
    %p39 = scmp.gt.s32.totalorder %s38, 0
    %s40 = scalar_select %p39, %s38, 0
    %s41 = ssub.s32 %s22, %s34
    %s42 = ssub.s32 %s37, %s40
    %s43 = sor.u32 %s41, %s42
    %p44 = scmp.eq.s32.totalorder %s43, 0
    %s46 = sadd.s32 %s45, 1
    %s47 = scalar_select %p44, %s45, %s46
    %p50 = pneg %p44
    %p51 = scmp.eq.s32.totalorder %s15, 1
    %p52 = por %p50, %p51
    %p53 = scmp.ne.s32.totalorder %s45, %s48
    %p54 = scmp.eq.s32.totalorder %s15, 0
    %p55 = por %p53, %p54
    %p56 = scmp.ne.s32.totalorder %s45, %s48
    %p57 = scmp.eq.s32.totalorder %s20, 1
    %p58 = por %p56, %p57
    %p59 = scmp.ne.s32.totalorder %s48, %s49
    %p60 = scmp.eq.s32.totalorder %s20, 0
    %p61 = por %p59, %p60
    %p62 = scmp.ne.s32.totalorder %s48, %s49
    %p63 = scmp.eq.s32.totalorder %s21, 1
    %p64 = por %p62, %p63
    %p66 = scmp.ne.s32.totalorder %s49, %s65
    %p67 = scmp.eq.s32.totalorder %s21, 0
    %p68 = por %p66, %p67
    %s69 = ssub.s32 %s22, %s34
    %s70 = ssub.s32 %s23, %s30
    %s71 = sor.u32 %s69, %s70
    %p72 = scmp.eq.s32.totalorder %s71, 0
    %s74 = sadd.s32 %s73, 1
    %s75 = scalar_select %p72, %s73, %s74
    %p78 = pneg %p72
    %p79 = scmp.eq.s32.totalorder %s15, 1
    %p80 = por %p78, %p79
    %p81 = scmp.ne.s32.totalorder %s73, %s76
    %p82 = scmp.eq.s32.totalorder %s15, 0
    %p83 = por %p81, %p82
    %p84 = scmp.ne.s32.totalorder %s73, %s76
    %p85 = scmp.eq.s32.totalorder %s20, 1
    %p86 = por %p84, %p85
    %p87 = scmp.ne.s32.totalorder %s76, %s77
    %p88 = scmp.eq.s32.totalorder %s20, 0
    %p89 = por %p87, %p88
    %p90 = scmp.ne.s32.totalorder %s76, %s77
    %p91 = scmp.eq.s32.totalorder %s21, 1
    %p92 = por %p90, %p91
    %p94 = scmp.ne.s32.totalorder %s77, %s93
    %p95 = scmp.eq.s32.totalorder %s21, 0
    %p96 = por %p94, %p95
    %s97 = sadd.s32 %s23, 1
    %p98 = scmp.lt.s32.totalorder %s97, 0
    %s99 = scalar_select %p98, %s97, 0
    %s100 = sadd.s32 %s30, 1
    %p101 = scmp.lt.s32.totalorder %s100, 0
    %s102 = scalar_select %p101, %s100, 0
    %s103 = ssub.s32 %s22, %s34
    %s104 = ssub.s32 %s99, %s102
    %s105 = sor.u32 %s103, %s104
    %p106 = scmp.eq.s32.totalorder %s105, 0
    %s108 = sadd.s32 %s107, 1
    %s109 = scalar_select %p106, %s107, %s108
    %p112 = pneg %p106
    %p113 = scmp.eq.s32.totalorder %s15, 1
    %p114 = por %p112, %p113
    %p115 = scmp.ne.s32.totalorder %s107, %s110
    %p116 = scmp.eq.s32.totalorder %s15, 0
    %p117 = por %p115, %p116
    %p118 = scmp.ne.s32.totalorder %s107, %s110
    %p119 = scmp.eq.s32.totalorder %s20, 1
    %p120 = por %p118, %p119
    %p121 = scmp.ne.s32.totalorder %s110, %s111
    %p122 = scmp.eq.s32.totalorder %s20, 0
    %p123 = por %p121, %p122
    %p124 = scmp.ne.s32.totalorder %s110, %s111
    %p125 = scmp.eq.s32.totalorder %s21, 1
    %p126 = por %p124, %p125
    %p128 = scmp.ne.s32.totalorder %s111, %s127
    %p129 = scmp.eq.s32.totalorder %s21, 0
    %p130 = por %p128, %p129
    %s132 = sadd.s32 %s131, 1
    %p135 = scmp.eq.s32.totalorder %s15, 1
    %p136 = scmp.ne.s32.totalorder %s131, %s133
    %p137 = scmp.eq.s32.totalorder %s15, 0
    %p138 = por %p136, %p137
    %p139 = scmp.ne.s32.totalorder %s131, %s133
    %p140 = scmp.eq.s32.totalorder %s20, 1
    %p141 = por %p139, %p140
    %p142 = scmp.ne.s32.totalorder %s133, %s134
    %p143 = scmp.eq.s32.totalorder %s20, 0
    %p144 = por %p142, %p143
    %p145 = scmp.ne.s32.totalorder %s133, %s134
    %p146 = scmp.eq.s32.totalorder %s21, 1
    %p147 = por %p145, %p146
    %p149 = scmp.ne.s32.totalorder %s134, %s148
    %p150 = scmp.eq.s32.totalorder %s21, 0
    %p151 = por %p149, %p150
    %s153 = sadd.s32 %s152, 1
    %p156 = scmp.eq.s32.totalorder %s15, 1
    %p157 = scmp.ne.s32.totalorder %s152, %s154
    %p158 = scmp.eq.s32.totalorder %s15, 0
    %p159 = por %p157, %p158
    %p160 = scmp.ne.s32.totalorder %s152, %s154
    %p161 = scmp.eq.s32.totalorder %s20, 1
    %p162 = por %p160, %p161
    %p163 = scmp.ne.s32.totalorder %s154, %s155
    %p164 = scmp.eq.s32.totalorder %s20, 0
    %p165 = por %p163, %p164
    %p166 = scmp.ne.s32.totalorder %s154, %s155
    %p167 = scmp.eq.s32.totalorder %s21, 1
    %p168 = por %p166, %p167
    %p170 = scmp.ne.s32.totalorder %s155, %s169
    %p171 = scmp.eq.s32.totalorder %s21, 0
    %p172 = por %p170, %p171
    %s174 = sadd.s32 %s173, 1
    %p177 = scmp.eq.s32.totalorder %s15, 1
    %p178 = scmp.ne.s32.totalorder %s173, %s175
    %p179 = scmp.eq.s32.totalorder %s15, 0
    %p180 = por %p178, %p179
    %p181 = scmp.ne.s32.totalorder %s173, %s175
    %p182 = scmp.eq.s32.totalorder %s20, 1
    %p183 = por %p181, %p182
    %p184 = scmp.ne.s32.totalorder %s175, %s176
    %p185 = scmp.eq.s32.totalorder %s20, 0
    %p186 = por %p184, %p185
    %p187 = scmp.ne.s32.totalorder %s175, %s176
    %p188 = scmp.eq.s32.totalorder %s21, 1
    %p189 = por %p187, %p188
    %p191 = scmp.ne.s32.totalorder %s176, %s190
    %p192 = scmp.eq.s32.totalorder %s21, 0
    %p193 = por %p191, %p192
    %s195 = sadd.s32 %s194, 1
    %p198 = scmp.eq.s32.totalorder %s15, 1
    %p199 = scmp.ne.s32.totalorder %s194, %s196
    %p200 = scmp.eq.s32.totalorder %s15, 0
    %p201 = por %p199, %p200
    %p202 = scmp.ne.s32.totalorder %s194, %s196
    %p203 = scmp.eq.s32.totalorder %s20, 1
    %p204 = por %p202, %p203
    %p205 = scmp.ne.s32.totalorder %s196, %s197
    %p206 = scmp.eq.s32.totalorder %s20, 0
    %p207 = por %p205, %p206
    %p208 = scmp.ne.s32.totalorder %s196, %s197
    %p209 = scmp.eq.s32.totalorder %s21, 1
    %p210 = por %p208, %p209
    %p212 = scmp.ne.s32.totalorder %s197, %s211
    %p213 = scmp.eq.s32.totalorder %s21, 0
    %p214 = por %p212, %p213
    %s215 = sadd.s32 %s22, %s23
    %s216 = sadd.s32 %s34, %s30
    %s217 = ssub.s32 %s215, %s216
    %p218 = scmp.eq.s32.totalorder %s217, 0
    %s220 = sadd.s32 %s219, 1
    %s221 = scalar_select %p218, %s219, %s220
    %p224 = pneg %p218
    %p225 = scmp.eq.s32.totalorder %s15, 1
    %p226 = por %p224, %p225
    %p227 = scmp.ne.s32.totalorder %s219, %s222
    %p228 = scmp.eq.s32.totalorder %s15, 0
    %p229 = por %p227, %p228
    %p230 = scmp.ne.s32.totalorder %s219, %s222
    %p231 = scmp.eq.s32.totalorder %s20, 1
    %p232 = por %p230, %p231
    %p233 = scmp.ne.s32.totalorder %s222, %s223
    %p234 = scmp.eq.s32.totalorder %s20, 0
    %p235 = por %p233, %p234
    %p236 = scmp.ne.s32.totalorder %s222, %s223
    %p237 = scmp.eq.s32.totalorder %s21, 1
    %p238 = por %p236, %p237
    %p240 = scmp.ne.s32.totalorder %s223, %s239
    %p241 = scmp.eq.s32.totalorder %s21, 0
    %p242 = por %p240, %p241
    %p243 = scmp.le.s32.totalorder 1, %s15
    %p244 = scmp.lt.s32.totalorder %s15, 3
    %p245 = pnand %p243, %p244
    %p246 = pneg %p245
    // Predicated region
    $region9: #{gan_model_forward.1} parent=5 // pred_check
      _
    $region10: #{gan_model_forward.1} parent=5 // pred_check_branch
      %248 = sbr.rel (%p245) target = $region12
    $region11: #{gan_model_forward.1} parent=5 // pred_region
      %s249 = ssub.s32 %s15, 1
      // Predicated region
      $region13: #{gan_model_forward.1} parent=11 // pred_check
        %p250 = pneg %p144
      $region14: #{gan_model_forward.1} parent=11 // pred_check_branch
        %252 = sbr.rel (%p250) target = $region16
      $region15: #{gan_model_forward.1} parent=11 // pred_region
        _
      $region16: #{gan_model_forward.1} parent=11 // pred_fallthru
        _
      // Predicated region
      $region17: #{gan_model_forward.1} parent=11 // pred_check
        %p253 = pneg %p165
      $region18: #{gan_model_forward.1} parent=11 // pred_check_branch
        %255 = sbr.rel (%p253) target = $region20
      $region19: #{gan_model_forward.1} parent=11 // pred_region
        _
      $region20: #{gan_model_forward.1} parent=11 // pred_fallthru
        _
      // Predicated region
      $region21: #{gan_model_forward.1} parent=11 // pred_check
        %p256 = pneg %p186
      $region22: #{gan_model_forward.1} parent=11 // pred_check_branch
        %258 = sbr.rel (%p256) target = $region24
      $region23: #{gan_model_forward.1} parent=11 // pred_region
        _
      $region24: #{gan_model_forward.1} parent=11 // pred_fallthru
        _
      // Predicated region
      $region25: #{gan_model_forward.1} parent=11 // pred_check
        %p259 = pneg %p207
      $region26: #{gan_model_forward.1} parent=11 // pred_check_branch
        %261 = sbr.rel (%p259) target = $region28
      $region27: #{gan_model_forward.1} parent=11 // pred_region
        _
      $region28: #{gan_model_forward.1} parent=11 // pred_fallthru
        _
    $region12: #{gan_model_forward.1} parent=5 // pred_fallthru
      _
    %p262 = scmp.lt.s32.totalorder %s15, 2
    // Predicated region
    $region29: #{gan_model_forward.1} parent=5 // pred_check
      %p263 = pneg %p262
    $region30: #{gan_model_forward.1} parent=5 // pred_check_branch
      %265 = sbr.rel (%p263) target = $region32
    $region31: #{gan_model_forward.1} parent=5 // pred_region
      // Predicated region
      $region33: #{gan_model_forward.1} parent=31 // pred_check
        %p266 = pneg %p55
      $region34: #{gan_model_forward.1} parent=31 // pred_check_branch
        %268 = sbr.rel (%p266) target = $region36
      $region35: #{gan_model_forward.1} parent=31 // pred_region
        %s269 = ssub.s32 %s23, 1
        %p270 = scmp.gt.s32.totalorder %s269, 0
        %s271 = scalar_select %p270, %s269, 0
        %s272 = smul.u32 2, %s271
        %p273 = scmp.lt.s32.totalorder %s22, 1
        %s274 = scalar_select %p273, %s22, 1
        %p275 = scmp.lt.s32.totalorder %s272, 1
        %s276 = scalar_select %p275, %s272, 1
        %s277 = smul.addr %s274, 2
        %s278 = sadd.s32 %s276, %s277
        %s279 = smul.addr %s278, 8
        %s280 = scalar_lea.vmem %s0, %s279
        %s281 = ssub.s32 %s23, 1
        %p282 = scmp.gt.s32.totalorder %s281, 0
        %s283 = scalar_select %p282, %s281, 0
        %s284 = smul.u32 2, %s283
      $region36: #{gan_model_forward.1} parent=31 // pred_fallthru
        _
      // Predicated region
      $region37: #{gan_model_forward.1} parent=31 // pred_check
        %p285 = pneg %p83
      $region38: #{gan_model_forward.1} parent=31 // pred_check_branch
        %287 = sbr.rel (%p285) target = $region40
      $region39: #{gan_model_forward.1} parent=31 // pred_region
        %s288 = smul.u32 2, %s23
        %p289 = scmp.lt.s32.totalorder %s22, 1
        %s290 = scalar_select %p289, %s22, 1
        %p291 = scmp.lt.s32.totalorder %s288, 1
        %s292 = scalar_select %p291, %s288, 1
        %s293 = smul.addr %s290, 2
        %s294 = sadd.s32 %s292, %s293
        %s295 = smul.addr %s294, 8
        %s296 = scalar_lea.vmem %s1, %s295
        %s297 = smul.u32 2, %s23
      $region40: #{gan_model_forward.1} parent=31 // pred_fallthru
        _
      // Predicated region
      $region41: #{gan_model_forward.1} parent=31 // pred_check
        %p298 = pneg %p117
      $region42: #{gan_model_forward.1} parent=31 // pred_check_branch
        %300 = sbr.rel (%p298) target = $region44
      $region43: #{gan_model_forward.1} parent=31 // pred_region
        %s301 = sadd.s32 %s23, 1
        %p302 = scmp.lt.s32.totalorder %s301, 0
        %s303 = scalar_select %p302, %s301, 0
        %s304 = smul.u32 2, %s303
        %p305 = scmp.lt.s32.totalorder %s22, 1
        %s306 = scalar_select %p305, %s22, 1
        %p307 = scmp.lt.s32.totalorder %s304, 1
        %s308 = scalar_select %p307, %s304, 1
        %s309 = smul.addr %s306, 2
        %s310 = sadd.s32 %s308, %s309
        %s311 = smul.addr %s310, 8
        %s312 = scalar_lea.vmem %s2, %s311
        %s313 = sadd.s32 %s23, 1
        %p314 = scmp.lt.s32.totalorder %s313, 0
        %s315 = scalar_select %p314, %s313, 0
        %s316 = smul.u32 2, %s315
      $region44: #{gan_model_forward.1} parent=31 // pred_fallthru
        _
    $region32: #{gan_model_forward.1} parent=5 // pred_fallthru
      _
    %p317 = scmp.le.s32.totalorder 1, %s15
    %p318 = scmp.lt.s32.totalorder %s15, 3
    %p319 = pnand %p317, %p318
    %p320 = pneg %p319
    // Predicated region
    $region45: #{gan_model_forward.1} parent=5 // pred_check
      _
    $region46: #{gan_model_forward.1} parent=5 // pred_check_branch
      %322 = sbr.rel (%p319) target = $region48
    $region47: #{gan_model_forward.1} parent=5 // pred_region
      %s323 = ssub.s32 %s15, 1
      %s324 = ssub.s32 %s25, 1
      %p325 = scmp.gt.s32.totalorder %s324, 0
      %s326 = scalar_select %p325, %s324, 0
      %s327 = smul.u32 2, %s326
      %p328 = scmp.lt.s32.totalorder %s24, 1
      %s329 = scalar_select %p328, %s24, 1
      %p330 = scmp.lt.s32.totalorder %s327, 1
      %s331 = scalar_select %p330, %s327, 1
      %s332 = smul.addr %s329, 2
      %s333 = sadd.s32 %s331, %s332
      %s334 = smul.addr %s333, 8
      %s335 = scalar_lea.vmem %s0, %s334
      %p336 = pneg %p61
      %p337 = pneg %p58
      %s338 = smul.u32 2, %s25
      %p339 = scmp.lt.s32.totalorder %s24, 1
      %s340 = scalar_select %p339, %s24, 1
      %p341 = scmp.lt.s32.totalorder %s338, 1
      %s342 = scalar_select %p341, %s338, 1
      %s343 = smul.addr %s340, 2
      %s344 = sadd.s32 %s342, %s343
      %s345 = smul.addr %s344, 8
      %s346 = scalar_lea.vmem %s1, %s345
      %p347 = pneg %p89
      %p348 = pneg %p86
      %s349 = sadd.s32 %s25, 1
      %p350 = scmp.lt.s32.totalorder %s349, 0
      %s351 = scalar_select %p350, %s349, 0
      %s352 = smul.u32 2, %s351
      %p353 = scmp.lt.s32.totalorder %s24, 1
      %s354 = scalar_select %p353, %s24, 1
      %p355 = scmp.lt.s32.totalorder %s352, 1
      %s356 = scalar_select %p355, %s352, 1
      %s357 = smul.addr %s354, 2
      %s358 = sadd.s32 %s356, %s357
      %s359 = smul.addr %s358, 8
      %s360 = scalar_lea.vmem %s2, %s359
      %p361 = pneg %p123
      %p362 = pneg %p120
      %p363 = pneg %p144
      %p364 = pneg %p141
      %p365 = pneg %p165
      %p366 = pneg %p162
      %p367 = pneg %p186
      %p368 = pneg %p183
      %p369 = pneg %p207
      %p370 = pneg %p204
      %p371 = pneg %p235
      %p372 = pneg %p232
      %s373 = sadd.s32 %s24, %s25
      %p374 = scmp.lt.s32.totalorder %s373, 1
      %s375 = scalar_select %p374, %s373, 1
      %s376 = smul.addr %s375, 2
      %s377 = scalar_lea.vmem %s7, %s376
      %s378 = ssub.s32 %s25, 1
      %p379 = scmp.gt.s32.totalorder %s378, 0
      %s380 = scalar_select %p379, %s378, 0
      %s381 = smul.u32 2, %s380
      %p382 = scmp.lt.s32.totalorder %s24, 1
      %s383 = scalar_select %p382, %s24, 1
      %p384 = scmp.lt.s32.totalorder %s381, 1
      %s385 = scalar_select %p384, %s381, 1
      %s386 = smul.addr %s383, 2
      %s387 = sadd.s32 %s385, %s386
      %s388 = smul.addr %s387, 8
      %s389 = scalar_lea.vmem %s0, %s388
      %s390 = ssub.s32 %s25, 1
      %p391 = scmp.gt.s32.totalorder %s390, 0
      %s392 = scalar_select %p391, %s390, 0
      %s393 = smul.u32 2, %s392
      %s394 = smul.u32 2, %s25
      %p395 = scmp.lt.s32.totalorder %s24, 1
      %s396 = scalar_select %p395, %s24, 1
      %p397 = scmp.lt.s32.totalorder %s394, 1
      %s398 = scalar_select %p397, %s394, 1
      %s399 = smul.addr %s396, 2
      %s400 = sadd.s32 %s398, %s399
      %s401 = smul.addr %s400, 8
      %s402 = scalar_lea.vmem %s1, %s401
      %s403 = smul.u32 2, %s25
      %s404 = sadd.s32 %s25, 1
      %p405 = scmp.lt.s32.totalorder %s404, 0
      %s406 = scalar_select %p405, %s404, 0
      %s407 = smul.u32 2, %s406
      %p408 = scmp.lt.s32.totalorder %s24, 1
      %s409 = scalar_select %p408, %s24, 1
      %p410 = scmp.lt.s32.totalorder %s407, 1
      %s411 = scalar_select %p410, %s407, 1
      %s412 = smul.addr %s409, 2
      %s413 = sadd.s32 %s411, %s412
      %s414 = smul.addr %s413, 8
      %s415 = scalar_lea.vmem %s2, %s414
      %s416 = sadd.s32 %s25, 1
      %p417 = scmp.lt.s32.totalorder %s416, 0
      %s418 = scalar_select %p417, %s416, 0
      %s419 = smul.u32 2, %s418
      %s420 = sadd.s32 %s24, %s25
      %p421 = scmp.lt.s32.totalorder %s420, 1
      %s422 = scalar_select %p421, %s420, 1
      %s423 = smul.addr %s422, 2
      %s424 = scalar_lea.vmem %s7, %s423
      %s425 = sadd.s32 %s24, %s25
      %v426 = vld [vmem:[%s389 + $0x8] sm:$0xff]
      %v427 = vld [vmem:[%s402] sm:$0xff]
      %v428 = vld [vmem:[%s402 + $0x8] sm:$0xff]
      %v429 = vld [vmem:[%s415] sm:$0xff]
      %v431 = vrot.slane %v426, 6
      %vm435 = vcmask 1041408
      %v436 = vrot.slane %v427, 6
      %v437 = vrot.slane %v428, 6
      %v438 = vsel %vm435, %v436, %v437
      %v443 = vrot.slane %v429, 6
      %v445 = vsel %vm435, %v431, %v436
      %v446 = vsel %vm435, %v437, %v443
      %v447 = vlaneseq
      %v448 = vshrl.u32 %v447, 7
      %v449 = vadd.s32 %v448, 8
      %v450 = vadd.s32 %v448, 16
      %s451 = smul.u32 %s25, 16
      %s452 = ssub.s32 %s451, 2
      %v453 = vstv %s452
      %v454 = vadd.s32 %v448, %v453
      %v455 = vadd.s32 %v449, %v453
      %v456 = vadd.s32 %v450, %v453
      %vm457 = vcmp.ge.s32.totalorder %v454, 0
      %vm458 = vcmp.ge.s32.totalorder %v455, 0
      %vm459 = vcmp.ge.s32.totalorder %v456, 0
      %vm460 = vcmp.lt.s32.totalorder %v454, 16
      %vm461 = vcmp.lt.s32.totalorder %v455, 16
      %vm462 = vcmp.lt.s32.totalorder %v456, 16
      %vm463 = vmand %vm457, %vm460
      %vm464 = vmand %vm458, %vm461
      %vm465 = vmand %vm459, %vm462
      %v466 = vsel %vm463, 1, 0
      %v467 = vsel %vm464, 1, 0
      %v468 = vsel %vm465, 1, 0
      %vm469 = vcmp.eq.s32.totalorder %v466, 1
      %vm470 = vcmp.eq.s32.totalorder %v467, 1
      %vm471 = vcmp.eq.s32.totalorder %v468, 1
      %v472 = vsel %vm469, %v445, 0.0
      %v473 = vsel %vm470, %v438, 0.0
      %v474 = vsel %vm471, %v446, 0.0
      %478 = vrot.lane.b32.xlu0 %v472, 4
      %v479 = vpop.permute.xlu0 %478
      %480 = vrot.lane.b32.xlu0 %v473, 4
      %v481 = vpop.permute.xlu0 %480
      %482 = vrot.lane.b32.xlu0 %v474, 4
      %v483 = vpop.permute.xlu0 %482
      %vm487 = vcmask 31744
      %v488 = vsel %vm487, 0.0, %v479
      %v489 = vsel %vm487, 0.0, %v481
      %v490 = vsel %vm487, 0.0, %v483
      %vm491 = vcmask 556032
      %v492 = vsel %vm491, %v488, 0.0
      %v493 = vsel %vm491, %v489, 0.0
      %v494 = vsel %vm491, %v490, 0.0
      %v495 = vld [vmem:[%s3] sm:$0xff]
      %v496 = vld [vmem:[%s3 + $0x8] sm:$0xff]
      %v497 = vld [vmem:[%s3 + $0x10] sm:$0xff]
      %v498 = vld [vmem:[%s3 + $0x18] sm:$0xff]
      %v499 = vld [vmem:[%s3 + $0x20] sm:$0xff]
      %v500 = vld [vmem:[%s3 + $0x28] sm:$0xff]
      %v501 = vld [vmem:[%s3 + $0x30] sm:$0xff]
      %v502 = vld [vmem:[%s3 + $0x38] sm:$0xff]
      %v503 = vld [vmem:[%s3 + $0x40] sm:$0xff]
      %v504 = vld [vmem:[%s3 + $0x48] sm:$0xff]
      %v505 = vld [vmem:[%s3 + $0x50] sm:$0xff]
      %v506 = vld [vmem:[%s3 + $0x58] sm:$0xff]
      %v507 = vld [vmem:[%s3 + $0x60] sm:$0xff]
      %v508 = vld [vmem:[%s3 + $0x68] sm:$0xff]
      %v509 = vld [vmem:[%s3 + $0x70] sm:$0xff]
      %v510 = vld [vmem:[%s3 + $0x78] sm:$0xff]
      %v511 = vld [vmem:[%s3 + $0x80] sm:$0xff]
      %v512 = vld [vmem:[%s3 + $0x88] sm:$0xff]
      %v513 = vld [vmem:[%s3 + $0x90] sm:$0xff]
      %v514 = vld [vmem:[%s3 + $0x98] sm:$0xff]
      %v515 = vld [vmem:[%s3 + $0xa0] sm:$0xff]
      %v516 = vld [vmem:[%s3 + $0xa8] sm:$0xff]
      %v517 = vld [vmem:[%s3 + $0xb0] sm:$0xff]
      %v518 = vld [vmem:[%s3 + $0xb8] sm:$0xff]
      %v519 = vld [vmem:[%s3 + $0xc0] sm:$0xff]
      %v520 = vld [vmem:[%s3 + $0xc8] sm:$0xff]
      %v521 = vld [vmem:[%s3 + $0xd0] sm:$0xff]
      %v522 = vld [vmem:[%s3 + $0xd8] sm:$0xff]
      %v523 = vld [vmem:[%s3 + $0xe0] sm:$0xff]
      %v524 = vld [vmem:[%s3 + $0xe8] sm:$0xff]
      %v525 = vld [vmem:[%s3 + $0xf0] sm:$0xff]
      %v526 = vld [vmem:[%s3 + $0xf8] sm:$0xff]
      %v527 = vld [vmem:[%s3 + $0x100] sm:$0xff]
      %v528 = vld [vmem:[%s3 + $0x108] sm:$0xff]
      %v529 = vld [vmem:[%s3 + $0x110] sm:$0xff]
      %v530 = vld [vmem:[%s3 + $0x118] sm:$0xff]
      %s531 = scalar_lea.vmem %s3, 288
      %v532 = vld [vmem:[%s531] sm:$0xff]
      %v533 = vld [vmem:[%s531 + $0x8] sm:$0xff]
      %v534 = vld [vmem:[%s531 + $0x10] sm:$0xff]
      %v535 = vld [vmem:[%s531 + $0x18] sm:$0xff]
      %v536 = vld [vmem:[%s531 + $0x20] sm:$0xff]
      %v537 = vld [vmem:[%s531 + $0x28] sm:$0xff]
      %v538 = vld [vmem:[%s531 + $0x30] sm:$0xff]
      %v539 = vld [vmem:[%s531 + $0x38] sm:$0xff]
      %v540 = vld [vmem:[%s531 + $0x40] sm:$0xff]
      %v541 = vld [vmem:[%s531 + $0x48] sm:$0xff]
      %v542 = vld [vmem:[%s531 + $0x50] sm:$0xff]
      %v543 = vld [vmem:[%s531 + $0x58] sm:$0xff]
      %v544 = vld [vmem:[%s531 + $0x60] sm:$0xff]
      %v545 = vld [vmem:[%s531 + $0x68] sm:$0xff]
      %v546 = vld [vmem:[%s531 + $0x70] sm:$0xff]
      %v547 = vld [vmem:[%s531 + $0x78] sm:$0xff]
      %v548 = vld [vmem:[%s531 + $0x80] sm:$0xff]
      %v549 = vld [vmem:[%s531 + $0x88] sm:$0xff]
      %v550 = vld [vmem:[%s531 + $0x90] sm:$0xff]
      %v551 = vld [vmem:[%s531 + $0x98] sm:$0xff]
      %v552 = vld [vmem:[%s531 + $0xa0] sm:$0xff]
      %v553 = vld [vmem:[%s531 + $0xa8] sm:$0xff]
      %v554 = vld [vmem:[%s531 + $0xb0] sm:$0xff]
      %v555 = vld [vmem:[%s531 + $0xb8] sm:$0xff]
      %v556 = vld [vmem:[%s531 + $0xc0] sm:$0xff]
      %v557 = vld [vmem:[%s531 + $0xc8] sm:$0xff]
      %v558 = vld [vmem:[%s531 + $0xd0] sm:$0xff]
      %v559 = vld [vmem:[%s531 + $0xd8] sm:$0xff]
      %v560 = vld [vmem:[%s531 + $0xe0] sm:$0xff]
      %v561 = vld [vmem:[%s531 + $0xe8] sm:$0xff]
      %v562 = vld [vmem:[%s531 + $0xf0] sm:$0xff]
      %v563 = vld [vmem:[%s531 + $0xf8] sm:$0xff]
      %v564 = vld [vmem:[%s531 + $0x100] sm:$0xff]
      %v565 = vld [vmem:[%s531 + $0x108] sm:$0xff]
      %v566 = vld [vmem:[%s531 + $0x110] sm:$0xff]
      %v567 = vld [vmem:[%s531 + $0x118] sm:$0xff]
      %vm571 = vcmask 1046528
      %v572 = vrot.slane %v492, 1
      %v573 = vrot.slane %v493, 1
      %v574 = vsel %vm571, %v572, %v573
      %v575 = vrot.slane %v494, 1
      %v576 = vsel %vm571, %v573, %v575
      %vm577 = vcmask 588800
      %v578 = vsel %vm577, %v574, 0
      %v580 = vsel %vm577, %v576, 0
      %v582 = vsel %vm577, %v575, 0
      %584 = vmatprep.subr.mxu0 %v533
      %585 = vmatpush1.msra.mxu0 %v532
      %586 = vmatprep.subr.mxu0 %v537
      %587 = vmatpush1.msra.mxu0 %v536
      %588 = vmatprep.subr.mxu0 %v541
      %589 = vmatpush1.msra.mxu0 %v540
      %590 = vmatprep.subr.mxu0 %v545
      %591 = vmatpush1.msra.mxu0 %v544
      %592 = vmatprep.subr.mxu0 %v549
      %593 = vmatpush1.msra.mxu0 %v548
      %594 = vmatprep.subr.mxu0 %v553
      %595 = vmatpush1.msra.mxu0 %v552
      %596 = vmatprep.subr.mxu0 %v557
      %597 = vmatpush1.msra.mxu0 %v556
      %598 = vmatprep.subr.mxu0 %v561
      %599 = vmatpush1.msra.mxu0 %v560
      %600 = vmatprep.subr.mxu0 %v565
      %601 = vmatpush1.msra.mxu0 %v564
      %602 = vmatprep.subr.mxu0 0.0
      %603 = vmatpush1.msra.mxu0 0.0
      %604 = vmatprep.subr.mxu0 0.0
      %605 = vmatpush1.msra.mxu0 0.0
      %606 = vmatprep.subr.mxu0 0.0
      %607 = vmatpush1.msra.mxu0 0.0
      %608 = vmatprep.subr.mxu0 0.0
      %609 = vmatpush1.msra.mxu0 0.0
      %610 = vmatprep.subr.mxu0 0.0
      %611 = vmatpush1.msra.mxu0 0.0
      %612 = vmatprep.subr.mxu0 0.0
      %613 = vmatpush1.msra.mxu0 0.0
      %614 = vmatprep.subr.mxu0 0.0
      %615 = vmatpush1.msra.mxu0 0.0
      %616 = vmatprep.subr.mxu0 0.0
      %617 = vmatpush1.msra.mxu0 0.0
      %618 = vmatprep.subr.mxu0 0.0
      %619 = vmatpush1.msra.mxu0 0.0
      %620 = vmatprep.subr.mxu0 0.0
      %621 = vmatpush1.msra.mxu0 0.0
      %622 = vmatprep.subr.mxu0 0.0
      %623 = vmatpush1.msra.mxu0 0.0
      %624 = vmatprep.subr.mxu0 0.0
      %625 = vmatpush1.msra.mxu0 0.0
      %626 = vmatprep.subr.mxu0 0.0
      %627 = vmatpush1.msra.mxu0 0.0
      %628 = vmatprep.subr.mxu0 0.0
      %629 = vmatpush1.msra.mxu0 0.0
      %630 = vmatprep.subr.mxu0 0.0
      %631 = vmatpush1.msra.mxu0 0.0
      %632 = vmatprep.subr.mxu0 0.0
      %633 = vmatpush1.msra.mxu0 0.0
      %634 = vmatprep.subr.mxu0 0.0
      %635 = vmatpush1.msra.mxu0 0.0
      %636 = vmatprep.subr.mxu0 0.0
      %637 = vmatpush1.msra.mxu0 0.0
      %638 = vmatprep.subr.mxu0 0.0
      %639 = vmatpush1.msra.mxu0 0.0
      %640 = vmatprep.subr.mxu0 0.0
      %641 = vmatpush1.msra.mxu0 0.0
      %642 = vmatprep.subr.mxu0 0.0
      %643 = vmatpush1.msra.mxu0 0.0
      %644 = vmatprep.subr.mxu0 0.0
      %645 = vmatpush1.msra.mxu0 0.0
      %646 = vmatprep.subr.mxu0 0.0
      %647 = vmatpush1.msra.mxu0 0.0
      %648 = vmatprep.mubr.f32.mxu0 0.0
      %649 = vmatmul.mubr.f32.gmra.mrb[0].mxu0 %v578
      %v650 = vpop.f32.mrb[0].mxu0
      %v651 = vadd.f32 0.0, %v650
      %v652 = vpop.f32.mrb[0].mxu0
      %v653 = vadd.f32 0.0, %v652
      %654 = vmatprep.mubr.f32.mxu0 0.0
      %655 = vmatmul.mubr.f32.gmra.mrb[0].mxu0 %v580
      %v656 = vpop.f32.mrb[0].mxu0
      %v657 = vadd.f32 0.0, %v656
      %v658 = vpop.f32.mrb[0].mxu0
      %v659 = vadd.f32 0.0, %v658
      %660 = vmatprep.mubr.f32.mxu0 0.0
      %661 = vmatmul.mubr.f32.gmra.mrb[0].mxu0 %v582
      %v662 = vpop.f32.mrb[0].mxu0
      %v663 = vadd.f32 0.0, %v662
      %v664 = vpop.f32.mrb[0].mxu0
      %v665 = vadd.f32 0.0, %v664
      %666 = vdwg.mxu0
      %667 = vmatprep.subr.mxu0 %v535
      %668 = vmatpush1.msra.mxu0 %v534
      %669 = vmatprep.subr.mxu0 %v539
      %670 = vmatpush1.msra.mxu0 %v538
      %671 = vmatprep.subr.mxu0 %v543
      %672 = vmatpush1.msra.mxu0 %v542
      %673 = vmatprep.subr.mxu0 %v547
      %674 = vmatpush1.msra.mxu0 %v546
      %675 = vmatprep.subr.mxu0 %v551
      %676 = vmatpush1.msra.mxu0 %v550
      %677 = vmatprep.subr.mxu0 %v555
      %678 = vmatpush1.msra.mxu0 %v554
      %679 = vmatprep.subr.mxu0 %v559
      %680 = vmatpush1.msra.mxu0 %v558
      %681 = vmatprep.subr.mxu0 %v563
      %682 = vmatpush1.msra.mxu0 %v562
      %683 = vmatprep.subr.mxu0 %v567
      %684 = vmatpush1.msra.mxu0 %v566
      %685 = vmatprep.subr.mxu0 0.0
      %686 = vmatpush1.msra.mxu0 0.0
      %687 = vmatprep.subr.mxu0 0.0
      %688 = vmatpush1.msra.mxu0 0.0
      %689 = vmatprep.subr.mxu0 0.0
      %690 = vmatpush1.msra.mxu0 0.0
      %691 = vmatprep.subr.mxu0 0.0
      %692 = vmatpush1.msra.mxu0 0.0
      %693 = vmatprep.subr.mxu0 0.0
      %694 = vmatpush1.msra.mxu0 0.0
      %695 = vmatprep.subr.mxu0 0.0
      %696 = vmatpush1.msra.mxu0 0.0
      %697 = vmatprep.subr.mxu0 0.0
      %698 = vmatpush1.msra.mxu0 0.0
      %699 = vmatprep.subr.mxu0 0.0
      %700 = vmatpush1.msra.mxu0 0.0
      %701 = vmatprep.subr.mxu0 0.0
      %702 = vmatpush1.msra.mxu0 0.0
      %703 = vmatprep.subr.mxu0 0.0
      %704 = vmatpush1.msra.mxu0 0.0
      %705 = vmatprep.subr.mxu0 0.0
      %706 = vmatpush1.msra.mxu0 0.0
      %707 = vmatprep.subr.mxu0 0.0
      %708 = vmatpush1.msra.mxu0 0.0
      %709 = vmatprep.subr.mxu0 0.0
      %710 = vmatpush1.msra.mxu0 0.0
      %711 = vmatprep.subr.mxu0 0.0
      %712 = vmatpush1.msra.mxu0 0.0
      %713 = vmatprep.subr.mxu0 0.0
      %714 = vmatpush1.msra.mxu0 0.0
      %715 = vmatprep.subr.mxu0 0.0
      %716 = vmatpush1.msra.mxu0 0.0
      %717 = vmatprep.subr.mxu0 0.0
      %718 = vmatpush1.msra.mxu0 0.0
      %719 = vmatprep.subr.mxu0 0.0
      %720 = vmatpush1.msra.mxu0 0.0
      %721 = vmatprep.subr.mxu0 0.0
      %722 = vmatpush1.msra.mxu0 0.0
      %723 = vmatprep.subr.mxu0 0.0
      %724 = vmatpush1.msra.mxu0 0.0
      %725 = vmatprep.subr.mxu0 0.0
      %726 = vmatpush1.msra.mxu0 0.0
      %727 = vmatprep.subr.mxu0 0.0
      %728 = vmatpush1.msra.mxu0 0.0
      %729 = vmatprep.subr.mxu0 0.0
      %730 = vmatpush1.msra.mxu0 0.0
      %731 = vmatprep.mubr.f32.mxu0 0.0
      %732 = vmatmul.mubr.f32.gmra.mrb[0].mxu0 %v578
      %v733 = vpop.f32.mrb[0].mxu0
      %v734 = vadd.f32 0.0, %v733
      %v735 = vpop.f32.mrb[0].mxu0
      %v736 = vadd.f32 0.0, %v735
      %737 = vmatprep.mubr.f32.mxu0 0.0
      %738 = vmatmul.mubr.f32.gmra.mrb[0].mxu0 %v580
      %v739 = vpop.f32.mrb[0].mxu0
      %v740 = vadd.f32 0.0, %v739
      %v741 = vpop.f32.mrb[0].mxu0
      %v742 = vadd.f32 0.0, %v741
      %743 = vmatprep.mubr.f32.mxu0 0.0
      %744 = vmatmul.mubr.f32.gmra.mrb[0].mxu0 %v582
      %v745 = vpop.f32.mrb[0].mxu0
      %v746 = vadd.f32 0.0, %v745
      %v747 = vpop.f32.mrb[0].mxu0
      %v748 = vadd.f32 0.0, %v747
      %749 = vdwg.mxu0
      %v750 = vsel %vm577, %v492, 0
      %v752 = vsel %vm577, %v493, 0
      %v754 = vsel %vm577, %v494, 0
      %756 = vmatprep.subr.mxu0 %v496
      %757 = vmatpush1.msra.mxu0 %v495
      %758 = vmatprep.subr.mxu0 %v500
      %759 = vmatpush1.msra.mxu0 %v499
      %760 = vmatprep.subr.mxu0 %v504
      %761 = vmatpush1.msra.mxu0 %v503
      %762 = vmatprep.subr.mxu0 %v508
      %763 = vmatpush1.msra.mxu0 %v507
      %764 = vmatprep.subr.mxu0 %v512
      %765 = vmatpush1.msra.mxu0 %v511
      %766 = vmatprep.subr.mxu0 %v516
      %767 = vmatpush1.msra.mxu0 %v515
      %768 = vmatprep.subr.mxu0 %v520
      %769 = vmatpush1.msra.mxu0 %v519
      %770 = vmatprep.subr.mxu0 %v524
      %771 = vmatpush1.msra.mxu0 %v523
      %772 = vmatprep.subr.mxu0 %v528
      %773 = vmatpush1.msra.mxu0 %v527
      %774 = vmatprep.subr.mxu0 0.0
      %775 = vmatpush1.msra.mxu0 0.0
      %776 = vmatprep.subr.mxu0 0.0
      %777 = vmatpush1.msra.mxu0 0.0
      %778 = vmatprep.subr.mxu0 0.0
      %779 = vmatpush1.msra.mxu0 0.0
      %780 = vmatprep.subr.mxu0 0.0
      %781 = vmatpush1.msra.mxu0 0.0
      %782 = vmatprep.subr.mxu0 0.0
      %783 = vmatpush1.msra.mxu0 0.0
      %784 = vmatprep.subr.mxu0 0.0
      %785 = vmatpush1.msra.mxu0 0.0
      %786 = vmatprep.subr.mxu0 0.0
      %787 = vmatpush1.msra.mxu0 0.0
      %788 = vmatprep.subr.mxu0 0.0
      %789 = vmatpush1.msra.mxu0 0.0
      %790 = vmatprep.subr.mxu0 0.0
      %791 = vmatpush1.msra.mxu0 0.0
      %792 = vmatprep.subr.mxu0 0.0
      %793 = vmatpush1.msra.mxu0 0.0
      %794 = vmatprep.subr.mxu0 0.0
      %795 = vmatpush1.msra.mxu0 0.0
      %796 = vmatprep.subr.mxu0 0.0
      %797 = vmatpush1.msra.mxu0 0.0
      %798 = vmatprep.subr.mxu0 0.0
      %799 = vmatpush1.msra.mxu0 0.0
      %800 = vmatprep.subr.mxu0 0.0
      %801 = vmatpush1.msra.mxu0 0.0
      %802 = vmatprep.subr.mxu0 0.0
      %803 = vmatpush1.msra.mxu0 0.0
      %804 = vmatprep.subr.mxu0 0.0
      %805 = vmatpush1.msra.mxu0 0.0
      %806 = vmatprep.subr.mxu0 0.0
      %807 = vmatpush1.msra.mxu0 0.0
      %808 = vmatprep.subr.mxu0 0.0
      %809 = vmatpush1.msra.mxu0 0.0
      %810 = vmatprep.subr.mxu0 0.0
      %811 = vmatpush1.msra.mxu0 0.0
      %812 = vmatprep.subr.mxu0 0.0
      %813 = vmatpush1.msra.mxu0 0.0
      %814 = vmatprep.subr.mxu0 0.0
      %815 = vmatpush1.msra.mxu0 0.0
      %816 = vmatprep.subr.mxu0 0.0
      %817 = vmatpush1.msra.mxu0 0.0
      %818 = vmatprep.subr.mxu0 0.0
      %819 = vmatpush1.msra.mxu0 0.0
      %820 = vmatprep.mubr.f32.mxu0 0.0
      %821 = vmatmul.mubr.f32.gmra.mrb[0].mxu0 %v750
      %v822 = vpop.f32.mrb[0].mxu0
      %v823 = vadd.f32 %v651, %v822
      %v824 = vpop.f32.mrb[0].mxu0
      %v825 = vadd.f32 %v653, %v824
      %826 = vmatprep.mubr.f32.mxu0 0.0
      %827 = vmatmul.mubr.f32.gmra.mrb[0].mxu0 %v752
      %v828 = vpop.f32.mrb[0].mxu0
      %v829 = vadd.f32 %v657, %v828
      %v830 = vpop.f32.mrb[0].mxu0
      %v831 = vadd.f32 %v659, %v830
      %832 = vmatprep.mubr.f32.mxu0 0.0
      %833 = vmatmul.mubr.f32.gmra.mrb[0].mxu0 %v754
      %v834 = vpop.f32.mrb[0].mxu0
      %v835 = vadd.f32 %v663, %v834
      %v836 = vpop.f32.mrb[0].mxu0
      %v837 = vadd.f32 %v665, %v836
      %838 = vdwg.mxu0
      %839 = vmatprep.subr.mxu0 %v498
      %840 = vmatpush1.msra.mxu0 %v497
      %841 = vmatprep.subr.mxu0 %v502
      %842 = vmatpush1.msra.mxu0 %v501
      %843 = vmatprep.subr.mxu0 %v506
      %844 = vmatpush1.msra.mxu0 %v505
      %845 = vmatprep.subr.mxu0 %v510
      %846 = vmatpush1.msra.mxu0 %v509
      %847 = vmatprep.subr.mxu0 %v514
      %848 = vmatpush1.msra.mxu0 %v513
      %849 = vmatprep.subr.mxu0 %v518
      %850 = vmatpush1.msra.mxu0 %v517
      %851 = vmatprep.subr.mxu0 %v522
      %852 = vmatpush1.msra.mxu0 %v521
      %853 = vmatprep.subr.mxu0 %v526
      %854 = vmatpush1.msra.mxu0 %v525
      %855 = vmatprep.subr.mxu0 %v530
      %856 = vmatpush1.msra.mxu0 %v529
      %857 = vmatprep.subr.mxu0 0.0
      %858 = vmatpush1.msra.mxu0 0.0
      %859 = vmatprep.subr.mxu0 0.0
      %860 = vmatpush1.msra.mxu0 0.0
      %861 = vmatprep.subr.mxu0 0.0
      %862 = vmatpush1.msra.mxu0 0.0
      %863 = vmatprep.subr.mxu0 0.0
      %864 = vmatpush1.msra.mxu0 0.0
      %865 = vmatprep.subr.mxu0 0.0
      %866 = vmatpush1.msra.mxu0 0.0
      %867 = vmatprep.subr.mxu0 0.0
      %868 = vmatpush1.msra.mxu0 0.0
      %869 = vmatprep.subr.mxu0 0.0
      %870 = vmatpush1.msra.mxu0 0.0
      %871 = vmatprep.subr.mxu0 0.0
      %872 = vmatpush1.msra.mxu0 0.0
      %873 = vmatprep.subr.mxu0 0.0
      %874 = vmatpush1.msra.mxu0 0.0
      %875 = vmatprep.subr.mxu0 0.0
      %876 = vmatpush1.msra.mxu0 0.0
      %877 = vmatprep.subr.mxu0 0.0
      %878 = vmatpush1.msra.mxu0 0.0
      %879 = vmatprep.subr.mxu0 0.0
      %880 = vmatpush1.msra.mxu0 0.0
      %881 = vmatprep.subr.mxu0 0.0
      %882 = vmatpush1.msra.mxu0 0.0
      %883 = vmatprep.subr.mxu0 0.0
      %884 = vmatpush1.msra.mxu0 0.0
      %885 = vmatprep.subr.mxu0 0.0
      %886 = vmatpush1.msra.mxu0 0.0
      %887 = vmatprep.subr.mxu0 0.0
      %888 = vmatpush1.msra.mxu0 0.0
      %889 = vmatprep.subr.mxu0 0.0
      %890 = vmatpush1.msra.mxu0 0.0
      %891 = vmatprep.subr.mxu0 0.0
      %892 = vmatpush1.msra.mxu0 0.0
      %893 = vmatprep.subr.mxu0 0.0
      %894 = vmatpush1.msra.mxu0 0.0
      %895 = vmatprep.subr.mxu0 0.0
      %896 = vmatpush1.msra.mxu0 0.0
      %897 = vmatprep.subr.mxu0 0.0
      %898 = vmatpush1.msra.mxu0 0.0
      %899 = vmatprep.subr.mxu0 0.0
      %900 = vmatpush1.msra.mxu0 0.0
      %901 = vmatprep.subr.mxu0 0.0
      %902 = vmatpush1.msra.mxu0 0.0
      %903 = vmatprep.mubr.f32.mxu0 0.0
      %904 = vmatmul.mubr.f32.gmra.mrb[0].mxu0 %v750
      %v905 = vpop.f32.mrb[0].mxu0
      %v906 = vadd.f32 %v734, %v905
      %v907 = vpop.f32.mrb[0].mxu0
      %v908 = vadd.f32 %v736, %v907
      %909 = vmatprep.mubr.f32.mxu0 0.0
      %910 = vmatmul.mubr.f32.gmra.mrb[0].mxu0 %v752
      %v911 = vpop.f32.mrb[0].mxu0
      %v912 = vadd.f32 %v740, %v911
      %v913 = vpop.f32.mrb[0].mxu0
      %v914 = vadd.f32 %v742, %v913
      %915 = vmatprep.mubr.f32.mxu0 0.0
      %916 = vmatmul.mubr.f32.gmra.mrb[0].mxu0 %v754
      %v917 = vpop.f32.mrb[0].mxu0
      %v918 = vadd.f32 %v746, %v917
      %v919 = vpop.f32.mrb[0].mxu0
      %v920 = vadd.f32 %v748, %v919
      %921 = vdwg.mxu0
      %s922 = scalar_lea.vmem %s3, 576
      %v923 = vld [vmem:[%s922] sm:$0xff]
      %v924 = vld [vmem:[%s922 + $0x8] sm:$0xff]
      %v925 = vld [vmem:[%s922 + $0x10] sm:$0xff]
      %v926 = vld [vmem:[%s922 + $0x18] sm:$0xff]
      %v927 = vld [vmem:[%s922 + $0x20] sm:$0xff]
      %v928 = vld [vmem:[%s922 + $0x28] sm:$0xff]
      %v929 = vld [vmem:[%s922 + $0x30] sm:$0xff]
      %v930 = vld [vmem:[%s922 + $0x38] sm:$0xff]
      %v931 = vld [vmem:[%s922 + $0x40] sm:$0xff]
      %v932 = vld [vmem:[%s922 + $0x48] sm:$0xff]
      %v933 = vld [vmem:[%s922 + $0x50] sm:$0xff]
      %v934 = vld [vmem:[%s922 + $0x58] sm:$0xff]
      %v935 = vld [vmem:[%s922 + $0x60] sm:$0xff]
      %v936 = vld [vmem:[%s922 + $0x68] sm:$0xff]
      %v937 = vld [vmem:[%s922 + $0x70] sm:$0xff]
      %v938 = vld [vmem:[%s922 + $0x78] sm:$0xff]
      %v939 = vld [vmem:[%s922 + $0x80] sm:$0xff]
      %v940 = vld [vmem:[%s922 + $0x88] sm:$0xff]
      %v941 = vld [vmem:[%s922 + $0x90] sm:$0xff]
      %v942 = vld [vmem:[%s922 + $0x98] sm:$0xff]
      %v943 = vld [vmem:[%s922 + $0xa0] sm:$0xff]
      %v944 = vld [vmem:[%s922 + $0xa8] sm:$0xff]
      %v945 = vld [vmem:[%s922 + $0xb0] sm:$0xff]
      %v946 = vld [vmem:[%s922 + $0xb8] sm:$0xff]
      %v947 = vld [vmem:[%s922 + $0xc0] sm:$0xff]
      %v948 = vld [vmem:[%s922 + $0xc8] sm:$0xff]
      %v949 = vld [vmem:[%s922 + $0xd0] sm:$0xff]
      %v950 = vld [vmem:[%s922 + $0xd8] sm:$0xff]
      %v951 = vld [vmem:[%s922 + $0xe0] sm:$0xff]
      %v952 = vld [vmem:[%s922 + $0xe8] sm:$0xff]
      %v953 = vld [vmem:[%s922 + $0xf0] sm:$0xff]
      %v954 = vld [vmem:[%s922 + $0xf8] sm:$0xff]
      %v955 = vld [vmem:[%s922 + $0x100] sm:$0xff]
      %v956 = vld [vmem:[%s922 + $0x108] sm:$0xff]
      %v957 = vld [vmem:[%s922 + $0x110] sm:$0xff]
      %v958 = vld [vmem:[%s922 + $0x118] sm:$0xff]
      %vm959 = vcmask 1045504
      %v960 = vrot.slane %v492, 2
      %v961 = vrot.slane %v493, 2
      %v962 = vsel %vm959, %v960, %v961
      %v963 = vrot.slane %v494, 2
      %v964 = vsel %vm959, %v961, %v963
      %v965 = vsel %vm577, %v962, 0
      %v967 = vsel %vm577, %v964, 0
      %v969 = vsel %vm577, %v963, 0
      %971 = vmatprep.subr.mxu0 %v924
      %972 = vmatpush1.msra.mxu0 %v923
      %973 = vmatprep.subr.mxu0 %v928
      %974 = vmatpush1.msra.mxu0 %v927
      %975 = vmatprep.subr.mxu0 %v932
      %976 = vmatpush1.msra.mxu0 %v931
      %977 = vmatprep.subr.mxu0 %v936
      %978 = vmatpush1.msra.mxu0 %v935
      %979 = vmatprep.subr.mxu0 %v940
      %980 = vmatpush1.msra.mxu0 %v939
      %981 = vmatprep.subr.mxu0 %v944
      %982 = vmatpush1.msra.mxu0 %v943
      %983 = vmatprep.subr.mxu0 %v948
      %984 = vmatpush1.msra.mxu0 %v947
      %985 = vmatprep.subr.mxu0 %v952
      %986 = vmatpush1.msra.mxu0 %v951
      %987 = vmatprep.subr.mxu0 %v956
      %988 = vmatpush1.msra.mxu0 %v955
      %989 = vmatprep.subr.mxu0 0.0
      %990 = vmatpush1.msra.mxu0 0.0
      %991 = vmatprep.subr.mxu0 0.0
      %992 = vmatpush1.msra.mxu0 0.0
      %993 = vmatprep.subr.mxu0 0.0
      %994 = vmatpush1.msra.mxu0 0.0
      %995 = vmatprep.subr.mxu0 0.0
      %996 = vmatpush1.msra.mxu0 0.0
      %997 = vmatprep.subr.mxu0 0.0
      %998 = vmatpush1.msra.mxu0 0.0
      %999 = vmatprep.subr.mxu0 0.0
      %1000 = vmatpush1.msra.mxu0 0.0
      %1001 = vmatprep.subr.mxu0 0.0
      %1002 = vmatpush1.msra.mxu0 0.0
      %1003 = vmatprep.subr.mxu0 0.0
      %1004 = vmatpush1.msra.mxu0 0.0
      %1005 = vmatprep.subr.mxu0 0.0
      %1006 = vmatpush1.msra.mxu0 0.0
      %1007 = vmatprep.subr.mxu0 0.0
      %1008 = vmatpush1.msra.mxu0 0.0
      %1009 = vmatprep.subr.mxu0 0.0
      %1010 = vmatpush1.msra.mxu0 0.0
      %1011 = vmatprep.subr.mxu0 0.0
      %1012 = vmatpush1.msra.mxu0 0.0
      %1013 = vmatprep.subr.mxu0 0.0
      %1014 = vmatpush1.msra.mxu0 0.0
      %1015 = vmatprep.subr.mxu0 0.0
      %1016 = vmatpush1.msra.mxu0 0.0
      %1017 = vmatprep.subr.mxu0 0.0
      %1018 = vmatpush1.msra.mxu0 0.0
      %1019 = vmatprep.subr.mxu0 0.0
      %1020 = vmatpush1.msra.mxu0 0.0
      %1021 = vmatprep.subr.mxu0 0.0
      %1022 = vmatpush1.msra.mxu0 0.0
      %1023 = vmatprep.subr.mxu0 0.0
      %1024 = vmatpush1.msra.mxu0 0.0
      %1025 = vmatprep.subr.mxu0 0.0
      %1026 = vmatpush1.msra.mxu0 0.0
      %1027 = vmatprep.subr.mxu0 0.0
      %1028 = vmatpush1.msra.mxu0 0.0
      %1029 = vmatprep.subr.mxu0 0.0
      %1030 = vmatpush1.msra.mxu0 0.0
      %1031 = vmatprep.subr.mxu0 0.0
      %1032 = vmatpush1.msra.mxu0 0.0
      %1033 = vmatprep.subr.mxu0 0.0
      %1034 = vmatpush1.msra.mxu0 0.0
      %1035 = vmatprep.mubr.f32.mxu0 0.0
      %1036 = vmatmul.mubr.f32.gmra.mrb[0].mxu0 %v965
      %v1037 = vpop.f32.mrb[0].mxu0
      %v1038 = vadd.f32 0.0, %v1037
      %v1039 = vpop.f32.mrb[0].mxu0
      %v1040 = vadd.f32 0.0, %v1039
      %1041 = vmatprep.mubr.f32.mxu0 0.0
      %1042 = vmatmul.mubr.f32.gmra.mrb[0].mxu0 %v967
      %v1043 = vpop.f32.mrb[0].mxu0
      %v1044 = vadd.f32 0.0, %v1043
      %v1045 = vpop.f32.mrb[0].mxu0
      %v1046 = vadd.f32 0.0, %v1045
      %1047 = vmatprep.mubr.f32.mxu0 0.0
      %1048 = vmatmul.mubr.f32.gmra.mrb[0].mxu0 %v969
      %v1049 = vpop.f32.mrb[0].mxu0
      %v1050 = vadd.f32 0.0, %v1049
      %v1051 = vpop.f32.mrb[0].mxu0
      %v1052 = vadd.f32 0.0, %v1051
      %1053 = vdwg.mxu0
      %1054 = vmatprep.subr.mxu0 %v926
      %1055 = vmatpush1.msra.mxu0 %v925
      %1056 = vmatprep.subr.mxu0 %v930
      %1057 = vmatpush1.msra.mxu0 %v929
      %1058 = vmatprep.subr.mxu0 %v934
      %1059 = vmatpush1.msra.mxu0 %v933
      %1060 = vmatprep.subr.mxu0 %v938
      %1061 = vmatpush1.msra.mxu0 %v937
      %1062 = vmatprep.subr.mxu0 %v942
      %1063 = vmatpush1.msra.mxu0 %v941
      %1064 = vmatprep.subr.mxu0 %v946
      %1065 = vmatpush1.msra.mxu0 %v945
      %1066 = vmatprep.subr.mxu0 %v950
      %1067 = vmatpush1.msra.mxu0 %v949
      %1068 = vmatprep.subr.mxu0 %v954
      %1069 = vmatpush1.msra.mxu0 %v953
      %1070 = vmatprep.subr.mxu0 %v958
      %1071 = vmatpush1.msra.mxu0 %v957
      %1072 = vmatprep.subr.mxu0 0.0
      %1073 = vmatpush1.msra.mxu0 0.0
      %1074 = vmatprep.subr.mxu0 0.0
      %1075 = vmatpush1.msra.mxu0 0.0
      %1076 = vmatprep.subr.mxu0 0.0
      %1077 = vmatpush1.msra.mxu0 0.0
      %1078 = vmatprep.subr.mxu0 0.0
      %1079 = vmatpush1.msra.mxu0 0.0
      %1080 = vmatprep.subr.mxu0 0.0
      %1081 = vmatpush1.msra.mxu0 0.0
      %1082 = vmatprep.subr.mxu0 0.0
      %1083 = vmatpush1.msra.mxu0 0.0
      %1084 = vmatprep.subr.mxu0 0.0
      %1085 = vmatpush1.msra.mxu0 0.0
      %1086 = vmatprep.subr.mxu0 0.0
      %1087 = vmatpush1.msra.mxu0 0.0
      %1088 = vmatprep.subr.mxu0 0.0
      %1089 = vmatpush1.msra.mxu0 0.0
      %1090 = vmatprep.subr.mxu0 0.0
      %1091 = vmatpush1.msra.mxu0 0.0
      %1092 = vmatprep.subr.mxu0 0.0
      %1093 = vmatpush1.msra.mxu0 0.0
      %1094 = vmatprep.subr.mxu0 0.0
      %1095 = vmatpush1.msra.mxu0 0.0
      %1096 = vmatprep.subr.mxu0 0.0
      %1097 = vmatpush1.msra.mxu0 0.0
      %1098 = vmatprep.subr.mxu0 0.0
      %1099 = vmatpush1.msra.mxu0 0.0
      %1100 = vmatprep.subr.mxu0 0.0
      %1101 = vmatpush1.msra.mxu0 0.0
      %1102 = vmatprep.subr.mxu0 0.0
      %1103 = vmatpush1.msra.mxu0 0.0
      %1104 = vmatprep.subr.mxu0 0.0
      %1105 = vmatpush1.msra.mxu0 0.0
      %1106 = vmatprep.subr.mxu0 0.0
      %1107 = vmatpush1.msra.mxu0 0.0
      %1108 = vmatprep.subr.mxu0 0.0
      %1109 = vmatpush1.msra.mxu0 0.0
      %1110 = vmatprep.subr.mxu0 0.0
      %1111 = vmatpush1.msra.mxu0 0.0
      %1112 = vmatprep.subr.mxu0 0.0
      %1113 = vmatpush1.msra.mxu0 0.0
      %1114 = vmatprep.subr.mxu0 0.0
      %1115 = vmatpush1.msra.mxu0 0.0
      %1116 = vmatprep.subr.mxu0 0.0
      %1117 = vmatpush1.msra.mxu0 0.0
      %1118 = vmatprep.mubr.f32.mxu0 0.0
      %1119 = vmatmul.mubr.f32.gmra.mrb[0].mxu0 %v965
      %v1120 = vpop.f32.mrb[0].mxu0
      %v1121 = vadd.f32 0.0, %v1120
      %v1122 = vpop.f32.mrb[0].mxu0
      %v1123 = vadd.f32 0.0, %v1122
      %1124 = vmatprep.mubr.f32.mxu0 0.0
      %1125 = vmatmul.mubr.f32.gmra.mrb[0].mxu0 %v967
      %v1126 = vpop.f32.mrb[0].mxu0
      %v1127 = vadd.f32 0.0, %v1126
      %v1128 = vpop.f32.mrb[0].mxu0
      %v1129 = vadd.f32 0.0, %v1128
      %1130 = vmatprep.mubr.f32.mxu0 0.0
      %1131 = vmatmul.mubr.f32.gmra.mrb[0].mxu0 %v969
      %v1132 = vpop.f32.mrb[0].mxu0
      %v1133 = vadd.f32 0.0, %v1132
      %v1134 = vpop.f32.mrb[0].mxu0
      %v1135 = vadd.f32 0.0, %v1134
      %1136 = vdwg.mxu0
      %v1137 = vadd.f32 %v823, %v1038
      %v1138 = vadd.f32 %v825, %v1040
      %v1139 = vadd.f32 %v906, %v1121
      %v1140 = vadd.f32 %v908, %v1123
      %v1141 = vadd.f32 %v829, %v1044
      %v1142 = vadd.f32 %v831, %v1046
      %v1143 = vadd.f32 %v912, %v1127
      %v1144 = vadd.f32 %v914, %v1129
      %v1145 = vadd.f32 %v835, %v1050
      %v1146 = vadd.f32 %v837, %v1052
      %v1147 = vadd.f32 %v918, %v1133
      %v1148 = vadd.f32 %v920, %v1135
      %v1149 = vld [vmem:[%s4] sm:$0xf]
      %v1151 = vlaneseq
      %v1152 = vshrl.u32 %v1151, 7
      %v1153 = vsub.s32 0, %v1152
      %v1154 = vrot.slane %v1149, %v1153
      %v1155 = vlaneseq
      %v1156 = vshrl.u32 %v1155, 7
      %v1157 = vsub.s32 1, %v1156
      %v1158 = vrot.slane %v1149, %v1157
      %v1159 = vlaneseq
      %v1160 = vshrl.u32 %v1159, 7
      %v1161 = vsub.s32 2, %v1160
      %v1162 = vrot.slane %v1149, %v1161
      %v1163 = vlaneseq
      %v1164 = vshrl.u32 %v1163, 7
      %v1165 = vsub.s32 3, %v1164
      %v1166 = vrot.slane %v1149, %v1165
      %v1171 = vadd.f32 %v1137, %v1154
      %v1172 = vadd.f32 %v1138, %v1158
      %v1173 = vadd.f32 %v1139, %v1162
      %v1174 = vadd.f32 %v1140, %v1166
      %v1175 = vadd.f32 %v1141, %v1154
      %v1176 = vadd.f32 %v1142, %v1158
      %v1177 = vadd.f32 %v1143, %v1162
      %v1178 = vadd.f32 %v1144, %v1166
      %v1179 = vadd.f32 %v1145, %v1154
      %v1180 = vadd.f32 %v1146, %v1158
      %v1181 = vadd.f32 %v1147, %v1162
      %v1182 = vadd.f32 %v1148, %v1166
      %v1183 = vmax.f32 %v1171, 0.0
      %v1184 = vmax.f32 %v1172, 0.0
      %v1185 = vmax.f32 %v1173, 0.0
      %v1186 = vmax.f32 %v1174, 0.0
      %v1187 = vmax.f32 %v1175, 0.0
      %v1188 = vmax.f32 %v1176, 0.0
      %v1189 = vmax.f32 %v1177, 0.0
      %v1190 = vmax.f32 %v1178, 0.0
      %v1191 = vmax.f32 %v1179, 0.0
      %v1192 = vmax.f32 %v1180, 0.0
      %v1193 = vmax.f32 %v1181, 0.0
      %v1194 = vmax.f32 %v1182, 0.0
      %s1195 = ssub.s32 %s451, 1
      %v1196 = vstv %s1195
      %v1197 = vadd.s32 %v448, %v1196
      %v1198 = vadd.s32 %v449, %v1196
      %v1199 = vadd.s32 %v450, %v1196
      %vm1200 = vcmp.ge.s32.totalorder %v1197, 0
      %vm1201 = vcmp.ge.s32.totalorder %v1198, 0
      %vm1202 = vcmp.ge.s32.totalorder %v1199, 0
      %vm1203 = vcmp.lt.s32.totalorder %v1197, 16
      %vm1204 = vcmp.lt.s32.totalorder %v1198, 16
      %vm1205 = vcmp.lt.s32.totalorder %v1199, 16
      %vm1206 = vmand %vm1200, %vm1203
      %vm1207 = vmand %vm1201, %vm1204
      %vm1208 = vmand %vm1202, %vm1205
      %v1209 = vsel %vm1206, 1, 0
      %v1210 = vsel %vm1207, 1, 0
      %v1211 = vsel %vm1208, 1, 0
      %vm1212 = vcmp.eq.s32.totalorder %v1209, 1
      %vm1213 = vcmp.eq.s32.totalorder %v1210, 1
      %vm1214 = vcmp.eq.s32.totalorder %v1211, 1
      %v1215 = vsel %vm1212, %v1183, 0.0
      %v1216 = vsel %vm1212, %v1184, 0.0
      %v1217 = vsel %vm1212, %v1185, 0.0
      %v1218 = vsel %vm1212, %v1186, 0.0
      %v1219 = vsel %vm1213, %v1187, 0.0
      %v1220 = vsel %vm1213, %v1188, 0.0
      %v1221 = vsel %vm1213, %v1189, 0.0
      %v1222 = vsel %vm1213, %v1190, 0.0
      %v1223 = vsel %vm1214, %v1191, 0.0
      %v1224 = vsel %vm1214, %v1192, 0.0
      %v1225 = vsel %vm1214, %v1193, 0.0
      %v1226 = vsel %vm1214, %v1194, 0.0
      %1239 = vrot.lane.b32.xlu0 %v1215, 32
      %v1240 = vpop.permute.xlu0 %1239
      %1241 = vrot.lane.b32.xlu0 %v1216, 32
      %v1242 = vpop.permute.xlu0 %1241
      %1243 = vrot.lane.b32.xlu0 %v1217, 32
      %v1244 = vpop.permute.xlu0 %1243
      %1245 = vrot.lane.b32.xlu0 %v1218, 32
      %v1246 = vpop.permute.xlu0 %1245
      %1247 = vrot.lane.b32.xlu0 %v1219, 32
      %v1248 = vpop.permute.xlu0 %1247
      %1249 = vrot.lane.b32.xlu0 %v1220, 32
      %v1250 = vpop.permute.xlu0 %1249
      %1251 = vrot.lane.b32.xlu0 %v1221, 32
      %v1252 = vpop.permute.xlu0 %1251
      %1253 = vrot.lane.b32.xlu0 %v1222, 32
      %v1254 = vpop.permute.xlu0 %1253
      %1255 = vrot.lane.b32.xlu0 %v1223, 32
      %v1256 = vpop.permute.xlu0 %1255
      %1257 = vrot.lane.b32.xlu0 %v1224, 32
      %v1258 = vpop.permute.xlu0 %1257
      %1259 = vrot.lane.b32.xlu0 %v1225, 32
      %v1260 = vpop.permute.xlu0 %1259
      %1261 = vrot.lane.b32.xlu0 %v1226, 32
      %v1262 = vpop.permute.xlu0 %1261
      %vm1263 = vcmask 261120
      %v1264 = vsel %vm1263, %v1240, %v1242
      %v1265 = vsel %vm1263, %v1242, %v1244
      %v1266 = vsel %vm1263, %v1244, %v1246
      %v1267 = vsel %vm1263, %v1248, %v1250
      %v1268 = vsel %vm1263, %v1250, %v1252
      %v1269 = vsel %vm1263, %v1252, %v1254
      %v1270 = vsel %vm1263, %v1256, %v1258
      %v1271 = vsel %vm1263, %v1258, %v1260
      %v1272 = vsel %vm1263, %v1260, %v1262
      %v1285 = vsel %vm1263, 0.0, %v1240
      %v1286 = vsel %vm1263, 0.0, %v1248
      %v1287 = vsel %vm1263, 0.0, %v1256
      %v1288 = vsel %vm1263, %v1246, 0.0
      %v1289 = vsel %vm1263, %v1254, 0.0
      %v1290 = vsel %vm1263, %v1262, 0.0
      %v1291 = vld [vmem:[%s5] sm:$0xff]
      %v1292 = vld [vmem:[%s5 + $0x8] sm:$0xff]
      %v1293 = vld [vmem:[%s5 + $0x10] sm:$0xff]
      %v1294 = vld [vmem:[%s5 + $0x18] sm:$0xff]
      %v1295 = vld [vmem:[%s5 + $0x20] sm:$0xff]
      %v1296 = vld [vmem:[%s5 + $0x28] sm:$0xff]
      %v1297 = vld [vmem:[%s5 + $0x30] sm:$0xff]
      %v1298 = vld [vmem:[%s5 + $0x38] sm:$0xff]
      %v1299 = vld [vmem:[%s5 + $0x40] sm:$0xff]
      %v1300 = vld [vmem:[%s5 + $0x48] sm:$0xff]
      %v1301 = vld [vmem:[%s5 + $0x50] sm:$0xff]
      %v1302 = vld [vmem:[%s5 + $0x58] sm:$0xff]
      %v1303 = vld [vmem:[%s5 + $0x60] sm:$0xff]
      %v1304 = vld [vmem:[%s5 + $0x68] sm:$0xff]
      %v1305 = vld [vmem:[%s5 + $0x70] sm:$0xff]
      %v1306 = vld [vmem:[%s5 + $0x78] sm:$0xff]
      %v1307 = vld [vmem:[%s5 + $0x80] sm:$0xff]
      %v1308 = vld [vmem:[%s5 + $0x88] sm:$0xff]
      %v1309 = vld [vmem:[%s5 + $0x90] sm:$0xff]
      %v1310 = vld [vmem:[%s5 + $0x98] sm:$0xff]
      %v1311 = vld [vmem:[%s5 + $0xa0] sm:$0xff]
      %v1312 = vld [vmem:[%s5 + $0xa8] sm:$0xff]
      %v1313 = vld [vmem:[%s5 + $0xb0] sm:$0xff]
      %v1314 = vld [vmem:[%s5 + $0xb8] sm:$0xff]
      %v1315 = vld [vmem:[%s5 + $0xc0] sm:$0xff]
      %v1316 = vld [vmem:[%s5 + $0xc8] sm:$0xff]
      %v1317 = vld [vmem:[%s5 + $0xd0] sm:$0xff]
      %v1318 = vld [vmem:[%s5 + $0xd8] sm:$0xff]
      %v1319 = vld [vmem:[%s5 + $0xe0] sm:$0xff]
      %v1320 = vld [vmem:[%s5 + $0xe8] sm:$0xff]
      %v1321 = vld [vmem:[%s5 + $0xf0] sm:$0xff]
      %v1322 = vld [vmem:[%s5 + $0xf8] sm:$0xff]
      %v1323 = vld [vmem:[%s5 + $0x100] sm:$0xff]
      %v1324 = vld [vmem:[%s5 + $0x108] sm:$0xff]
      %v1325 = vld [vmem:[%s5 + $0x110] sm:$0xff]
      %v1326 = vld [vmem:[%s5 + $0x118] sm:$0xff]
      %v1327 = vld [vmem:[%s5 + $0x120] sm:$0xff]
      %v1328 = vld [vmem:[%s5 + $0x128] sm:$0xff]
      %v1329 = vld [vmem:[%s5 + $0x130] sm:$0xff]
      %v1330 = vld [vmem:[%s5 + $0x138] sm:$0xff]
      %v1331 = vld [vmem:[%s5 + $0x140] sm:$0xff]
      %v1332 = vld [vmem:[%s5 + $0x148] sm:$0xff]
      %v1333 = vld [vmem:[%s5 + $0x150] sm:$0xff]
      %v1334 = vld [vmem:[%s5 + $0x158] sm:$0xff]
      %v1335 = vld [vmem:[%s5 + $0x160] sm:$0xff]
      %v1336 = vld [vmem:[%s5 + $0x168] sm:$0xff]
      %v1337 = vld [vmem:[%s5 + $0x170] sm:$0xff]
      %v1338 = vld [vmem:[%s5 + $0x178] sm:$0xff]
      %v1339 = vld [vmem:[%s5 + $0x180] sm:$0xff]
      %v1340 = vld [vmem:[%s5 + $0x188] sm:$0xff]
      %v1341 = vld [vmem:[%s5 + $0x190] sm:$0xff]
      %v1342 = vld [vmem:[%s5 + $0x198] sm:$0xff]
      %v1343 = vld [vmem:[%s5 + $0x1a0] sm:$0xff]
      %v1344 = vld [vmem:[%s5 + $0x1a8] sm:$0xff]
      %v1345 = vld [vmem:[%s5 + $0x1b0] sm:$0xff]
      %v1346 = vld [vmem:[%s5 + $0x1b8] sm:$0xff]
      %v1347 = vld [vmem:[%s5 + $0x1c0] sm:$0xff]
      %v1348 = vld [vmem:[%s5 + $0x1c8] sm:$0xff]
      %v1349 = vld [vmem:[%s5 + $0x1d0] sm:$0xff]
      %v1350 = vld [vmem:[%s5 + $0x1d8] sm:$0xff]
      %v1351 = vld [vmem:[%s5 + $0x1e0] sm:$0xff]
      %v1352 = vld [vmem:[%s5 + $0x1e8] sm:$0xff]
      %v1353 = vld [vmem:[%s5 + $0x1f0] sm:$0xff]
      %v1354 = vld [vmem:[%s5 + $0x1f8] sm:$0xff]
      %v1355 = vld [vmem:[%s5 + $0x200] sm:$0xff]
      %v1356 = vld [vmem:[%s5 + $0x208] sm:$0xff]
      %v1357 = vld [vmem:[%s5 + $0x210] sm:$0xff]
      %v1358 = vld [vmem:[%s5 + $0x218] sm:$0xff]
      %v1359 = vld [vmem:[%s5 + $0x220] sm:$0xff]
      %v1360 = vld [vmem:[%s5 + $0x228] sm:$0xff]
      %v1361 = vld [vmem:[%s5 + $0x230] sm:$0xff]
      %v1362 = vld [vmem:[%s5 + $0x238] sm:$0xff]
      %s1363 = scalar_lea.vmem %s5, 576
      %v1364 = vld [vmem:[%s1363] sm:$0xff]
      %v1365 = vld [vmem:[%s1363 + $0x8] sm:$0xff]
      %v1366 = vld [vmem:[%s1363 + $0x10] sm:$0xff]
      %v1367 = vld [vmem:[%s1363 + $0x18] sm:$0xff]
      %v1368 = vld [vmem:[%s1363 + $0x20] sm:$0xff]
      %v1369 = vld [vmem:[%s1363 + $0x28] sm:$0xff]
      %v1370 = vld [vmem:[%s1363 + $0x30] sm:$0xff]
      %v1371 = vld [vmem:[%s1363 + $0x38] sm:$0xff]
      %v1372 = vld [vmem:[%s1363 + $0x40] sm:$0xff]
      %v1373 = vld [vmem:[%s1363 + $0x48] sm:$0xff]
      %v1374 = vld [vmem:[%s1363 + $0x50] sm:$0xff]
      %v1375 = vld [vmem:[%s1363 + $0x58] sm:$0xff]
      %v1376 = vld [vmem:[%s1363 + $0x60] sm:$0xff]
      %v1377 = vld [vmem:[%s1363 + $0x68] sm:$0xff]
      %v1378 = vld [vmem:[%s1363 + $0x70] sm:$0xff]
      %v1379 = vld [vmem:[%s1363 + $0x78] sm:$0xff]
      %v1380 = vld [vmem:[%s1363 + $0x80] sm:$0xff]
      %v1381 = vld [vmem:[%s1363 + $0x88] sm:$0xff]
      %v1382 = vld [vmem:[%s1363 + $0x90] sm:$0xff]
      %v1383 = vld [vmem:[%s1363 + $0x98] sm:$0xff]
      %v1384 = vld [vmem:[%s1363 + $0xa0] sm:$0xff]
      %v1385 = vld [vmem:[%s1363 + $0xa8] sm:$0xff]
      %v1386 = vld [vmem:[%s1363 + $0xb0] sm:$0xff]
      %v1387 = vld [vmem:[%s1363 + $0xb8] sm:$0xff]
      %v1388 = vld [vmem:[%s1363 + $0xc0] sm:$0xff]
      %v1389 = vld [vmem:[%s1363 + $0xc8] sm:$0xff]
      %v1390 = vld [vmem:[%s1363 + $0xd0] sm:$0xff]
      %v1391 = vld [vmem:[%s1363 + $0xd8] sm:$0xff]
      %v1392 = vld [vmem:[%s1363 + $0xe0] sm:$0xff]
      %v1393 = vld [vmem:[%s1363 + $0xe8] sm:$0xff]
      %v1394 = vld [vmem:[%s1363 + $0xf0] sm:$0xff]
      %v1395 = vld [vmem:[%s1363 + $0xf8] sm:$0xff]
      %v1396 = vld [vmem:[%s1363 + $0x100] sm:$0xff]
      %v1397 = vld [vmem:[%s1363 + $0x108] sm:$0xff]
      %v1398 = vld [vmem:[%s1363 + $0x110] sm:$0xff]
      %v1399 = vld [vmem:[%s1363 + $0x118] sm:$0xff]
      %v1400 = vld [vmem:[%s1363 + $0x120] sm:$0xff]
      %v1401 = vld [vmem:[%s1363 + $0x128] sm:$0xff]
      %v1402 = vld [vmem:[%s1363 + $0x130] sm:$0xff]
      %v1403 = vld [vmem:[%s1363 + $0x138] sm:$0xff]
      %v1404 = vld [vmem:[%s1363 + $0x140] sm:$0xff]
      %v1405 = vld [vmem:[%s1363 + $0x148] sm:$0xff]
      %v1406 = vld [vmem:[%s1363 + $0x150] sm:$0xff]
      %v1407 = vld [vmem:[%s1363 + $0x158] sm:$0xff]
      %v1408 = vld [vmem:[%s1363 + $0x160] sm:$0xff]
      %v1409 = vld [vmem:[%s1363 + $0x168] sm:$0xff]
      %v1410 = vld [vmem:[%s1363 + $0x170] sm:$0xff]
      %v1411 = vld [vmem:[%s1363 + $0x178] sm:$0xff]
      %v1412 = vld [vmem:[%s1363 + $0x180] sm:$0xff]
      %v1413 = vld [vmem:[%s1363 + $0x188] sm:$0xff]
      %v1414 = vld [vmem:[%s1363 + $0x190] sm:$0xff]
      %v1415 = vld [vmem:[%s1363 + $0x198] sm:$0xff]
      %v1416 = vld [vmem:[%s1363 + $0x1a0] sm:$0xff]
      %v1417 = vld [vmem:[%s1363 + $0x1a8] sm:$0xff]
      %v1418 = vld [vmem:[%s1363 + $0x1b0] sm:$0xff]
      %v1419 = vld [vmem:[%s1363 + $0x1b8] sm:$0xff]
      %v1420 = vld [vmem:[%s1363 + $0x1c0] sm:$0xff]
      %v1421 = vld [vmem:[%s1363 + $0x1c8] sm:$0xff]
      %v1422 = vld [vmem:[%s1363 + $0x1d0] sm:$0xff]
      %v1423 = vld [vmem:[%s1363 + $0x1d8] sm:$0xff]
      %v1424 = vld [vmem:[%s1363 + $0x1e0] sm:$0xff]
      %v1425 = vld [vmem:[%s1363 + $0x1e8] sm:$0xff]
      %v1426 = vld [vmem:[%s1363 + $0x1f0] sm:$0xff]
      %v1427 = vld [vmem:[%s1363 + $0x1f8] sm:$0xff]
      %v1428 = vld [vmem:[%s1363 + $0x200] sm:$0xff]
      %v1429 = vld [vmem:[%s1363 + $0x208] sm:$0xff]
      %v1430 = vld [vmem:[%s1363 + $0x210] sm:$0xff]
      %v1431 = vld [vmem:[%s1363 + $0x218] sm:$0xff]
      %v1432 = vld [vmem:[%s1363 + $0x220] sm:$0xff]
      %v1433 = vld [vmem:[%s1363 + $0x228] sm:$0xff]
      %v1434 = vld [vmem:[%s1363 + $0x230] sm:$0xff]
      %v1435 = vld [vmem:[%s1363 + $0x238] sm:$0xff]
      %v1442 = vrot.slane %v1285, 1
      %v1443 = vrot.slane %v1286, 1
      %v1444 = vsel %vm571, %v1442, %v1443
      %v1445 = vrot.slane %v1264, 1
      %v1446 = vrot.slane %v1267, 1
      %v1447 = vsel %vm571, %v1445, %v1446
      %v1448 = vrot.slane %v1265, 1
      %v1449 = vrot.slane %v1268, 1
      %v1450 = vsel %vm571, %v1448, %v1449
      %v1451 = vrot.slane %v1266, 1
      %v1452 = vrot.slane %v1269, 1
      %v1453 = vsel %vm571, %v1451, %v1452
      %v1454 = vrot.slane %v1288, 1
      %v1455 = vrot.slane %v1289, 1
      %v1456 = vsel %vm571, %v1454, %v1455
      %v1457 = vrot.slane %v1287, 1
      %v1458 = vsel %vm571, %v1443, %v1457
      %v1459 = vrot.slane %v1270, 1
      %v1460 = vsel %vm571, %v1446, %v1459
      %v1461 = vrot.slane %v1271, 1
      %v1462 = vsel %vm571, %v1449, %v1461
      %v1463 = vrot.slane %v1272, 1
      %v1464 = vsel %vm571, %v1452, %v1463
      %v1465 = vrot.slane %v1290, 1
      %v1466 = vsel %vm571, %v1455, %v1465
      %vm1475 = vcmask 523264
      %v1476 = vsel %vm1475, %v1456, 0
      %v1478 = vsel %vm1475, %v1466, 0
      %1480 = vmatprep.subr.mxu0 0.0
      %1481 = vmatpush1.msra.mxu0 %v1364
      %1482 = vmatprep.subr.mxu0 0.0
      %1483 = vmatpush1.msra.mxu0 %v1365
      %1484 = vmatprep.subr.mxu0 0.0
      %1485 = vmatpush1.msra.mxu0 %v1366
      %1486 = vmatprep.subr.mxu0 0.0
      %1487 = vmatpush1.msra.mxu0 %v1367
      %1488 = vmatprep.subr.mxu0 0.0
      %1489 = vmatpush1.msra.mxu0 %v1368
      %1490 = vmatprep.subr.mxu0 0.0
      %1491 = vmatpush1.msra.mxu0 %v1369
      %1492 = vmatprep.subr.mxu0 0.0
      %1493 = vmatpush1.msra.mxu0 %v1370
      %1494 = vmatprep.subr.mxu0 0.0
      %1495 = vmatpush1.msra.mxu0 %v1371
      %1496 = vmatprep.subr.mxu0 0.0
      %1497 = vmatpush1.msra.mxu0 %v1372
      %1498 = vmatprep.subr.mxu0 0.0
      %1499 = vmatpush1.msra.mxu0 %v1373
      %1500 = vmatprep.subr.mxu0 0.0
      %1501 = vmatpush1.msra.mxu0 %v1374
      %1502 = vmatprep.subr.mxu0 0.0
      %1503 = vmatpush1.msra.mxu0 %v1375
      %1504 = vmatprep.subr.mxu0 0.0
      %1505 = vmatpush1.msra.mxu0 %v1376
      %1506 = vmatprep.subr.mxu0 0.0
      %1507 = vmatpush1.msra.mxu0 %v1377
      %1508 = vmatprep.subr.mxu0 0.0
      %1509 = vmatpush1.msra.mxu0 %v1378
      %1510 = vmatprep.subr.mxu0 0.0
      %1511 = vmatpush1.msra.mxu0 %v1379
      %1512 = vmatprep.subr.mxu0 0.0
      %1513 = vmatpush1.msra.mxu0 %v1380
      %1514 = vmatprep.subr.mxu0 0.0
      %1515 = vmatpush1.msra.mxu0 %v1381
      %1516 = vmatprep.subr.mxu0 0.0
      %1517 = vmatpush1.msra.mxu0 %v1382
      %1518 = vmatprep.subr.mxu0 0.0
      %1519 = vmatpush1.msra.mxu0 %v1383
      %1520 = vmatprep.subr.mxu0 0.0
      %1521 = vmatpush1.msra.mxu0 %v1384
      %1522 = vmatprep.subr.mxu0 0.0
      %1523 = vmatpush1.msra.mxu0 %v1385
      %1524 = vmatprep.subr.mxu0 0.0
      %1525 = vmatpush1.msra.mxu0 %v1386
      %1526 = vmatprep.subr.mxu0 0.0
      %1527 = vmatpush1.msra.mxu0 %v1387
      %1528 = vmatprep.subr.mxu0 0.0
      %1529 = vmatpush1.msra.mxu0 %v1388
      %1530 = vmatprep.subr.mxu0 0.0
      %1531 = vmatpush1.msra.mxu0 %v1389
      %1532 = vmatprep.subr.mxu0 0.0
      %1533 = vmatpush1.msra.mxu0 %v1390
      %1534 = vmatprep.subr.mxu0 0.0
      %1535 = vmatpush1.msra.mxu0 %v1391
      %1536 = vmatprep.subr.mxu0 0.0
      %1537 = vmatpush1.msra.mxu0 %v1392
      %1538 = vmatprep.subr.mxu0 0.0
      %1539 = vmatpush1.msra.mxu0 %v1393
      %1540 = vmatprep.subr.mxu0 0.0
      %1541 = vmatpush1.msra.mxu0 %v1394
      %1542 = vmatprep.subr.mxu0 0.0
      %1543 = vmatpush1.msra.mxu0 %v1395
      %1544 = vmatprep.mubr.f32.mxu0 %v1447
      %1545 = vmatmul.mubr.f32.gmra.mrb[0].mxu0 %v1444
      %v1546 = vpop.f32.mrb[0].mxu0
      %v1547 = vadd.f32 0.0, %v1546
      %v1548 = vpop.f32.mrb[0].mxu0
      %1549 = vmatprep.mubr.f32.mxu0 %v1460
      %1550 = vmatmul.mubr.f32.gmra.mrb[0].mxu0 %v1458
      %v1551 = vpop.f32.mrb[0].mxu0
      %v1552 = vadd.f32 0.0, %v1551
      %v1553 = vpop.f32.mrb[0].mxu0
      %1554 = vdwg.mxu0
      %1555 = vmatprep.subr.mxu0 0.0
      %1556 = vmatpush1.msra.mxu0 %v1396
      %1557 = vmatprep.subr.mxu0 0.0
      %1558 = vmatpush1.msra.mxu0 %v1397
      %1559 = vmatprep.subr.mxu0 0.0
      %1560 = vmatpush1.msra.mxu0 %v1398
      %1561 = vmatprep.subr.mxu0 0.0
      %1562 = vmatpush1.msra.mxu0 %v1399
      %1563 = vmatprep.subr.mxu0 0.0
      %1564 = vmatpush1.msra.mxu0 %v1400
      %1565 = vmatprep.subr.mxu0 0.0
      %1566 = vmatpush1.msra.mxu0 %v1401
      %1567 = vmatprep.subr.mxu0 0.0
      %1568 = vmatpush1.msra.mxu0 %v1402
      %1569 = vmatprep.subr.mxu0 0.0
      %1570 = vmatpush1.msra.mxu0 %v1403
      %1571 = vmatprep.subr.mxu0 0.0
      %1572 = vmatpush1.msra.mxu0 %v1404
      %1573 = vmatprep.subr.mxu0 0.0
      %1574 = vmatpush1.msra.mxu0 %v1405
      %1575 = vmatprep.subr.mxu0 0.0
      %1576 = vmatpush1.msra.mxu0 %v1406
      %1577 = vmatprep.subr.mxu0 0.0
      %1578 = vmatpush1.msra.mxu0 %v1407
      %1579 = vmatprep.subr.mxu0 0.0
      %1580 = vmatpush1.msra.mxu0 %v1408
      %1581 = vmatprep.subr.mxu0 0.0
      %1582 = vmatpush1.msra.mxu0 %v1409
      %1583 = vmatprep.subr.mxu0 0.0
      %1584 = vmatpush1.msra.mxu0 %v1410
      %1585 = vmatprep.subr.mxu0 0.0
      %1586 = vmatpush1.msra.mxu0 %v1411
      %1587 = vmatprep.subr.mxu0 0.0
      %1588 = vmatpush1.msra.mxu0 %v1412
      %1589 = vmatprep.subr.mxu0 0.0
      %1590 = vmatpush1.msra.mxu0 %v1413
      %1591 = vmatprep.subr.mxu0 0.0
      %1592 = vmatpush1.msra.mxu0 %v1414
      %1593 = vmatprep.subr.mxu0 0.0
      %1594 = vmatpush1.msra.mxu0 %v1415
      %1595 = vmatprep.subr.mxu0 0.0
      %1596 = vmatpush1.msra.mxu0 %v1416
      %1597 = vmatprep.subr.mxu0 0.0
      %1598 = vmatpush1.msra.mxu0 %v1417
      %1599 = vmatprep.subr.mxu0 0.0
      %1600 = vmatpush1.msra.mxu0 %v1418
      %1601 = vmatprep.subr.mxu0 0.0
      %1602 = vmatpush1.msra.mxu0 %v1419
      %1603 = vmatprep.subr.mxu0 0.0
      %1604 = vmatpush1.msra.mxu0 %v1420
      %1605 = vmatprep.subr.mxu0 0.0
      %1606 = vmatpush1.msra.mxu0 %v1421
      %1607 = vmatprep.subr.mxu0 0.0
      %1608 = vmatpush1.msra.mxu0 %v1422
      %1609 = vmatprep.subr.mxu0 0.0
      %1610 = vmatpush1.msra.mxu0 %v1423
      %1611 = vmatprep.subr.mxu0 0.0
      %1612 = vmatpush1.msra.mxu0 %v1424
      %1613 = vmatprep.subr.mxu0 0.0
      %1614 = vmatpush1.msra.mxu0 %v1425
      %1615 = vmatprep.subr.mxu0 0.0
      %1616 = vmatpush1.msra.mxu0 %v1426
      %1617 = vmatprep.subr.mxu0 0.0
      %1618 = vmatpush1.msra.mxu0 %v1427
      %1619 = vmatprep.mubr.f32.mxu0 %v1453
      %1620 = vmatmul.mubr.f32.gmra.mrb[0].mxu0 %v1450
      %v1621 = vpop.f32.mrb[0].mxu0
      %v1622 = vadd.f32 %v1547, %v1621
      %v1623 = vpop.f32.mrb[0].mxu0
      %1624 = vmatprep.mubr.f32.mxu0 %v1464
      %1625 = vmatmul.mubr.f32.gmra.mrb[0].mxu0 %v1462
      %v1626 = vpop.f32.mrb[0].mxu0
      %v1627 = vadd.f32 %v1552, %v1626
      %v1628 = vpop.f32.mrb[0].mxu0
      %1629 = vdwg.mxu0
      %1630 = vmatprep.subr.mxu0 0.0
      %1631 = vmatpush1.msra.mxu0 %v1428
      %1632 = vmatprep.subr.mxu0 0.0
      %1633 = vmatpush1.msra.mxu0 %v1429
      %1634 = vmatprep.subr.mxu0 0.0
      %1635 = vmatpush1.msra.mxu0 %v1430
      %1636 = vmatprep.subr.mxu0 0.0
      %1637 = vmatpush1.msra.mxu0 %v1431
      %1638 = vmatprep.subr.mxu0 0.0
      %1639 = vmatpush1.msra.mxu0 %v1432
      %1640 = vmatprep.subr.mxu0 0.0
      %1641 = vmatpush1.msra.mxu0 %v1433
      %1642 = vmatprep.subr.mxu0 0.0
      %1643 = vmatpush1.msra.mxu0 %v1434
      %1644 = vmatprep.subr.mxu0 0.0
      %1645 = vmatpush1.msra.mxu0 %v1435
      %1646 = vmatprep.subr.mxu0 0.0
      %1647 = vmatpush1.msra.mxu0 0.0
      %1648 = vmatprep.subr.mxu0 0.0
      %1649 = vmatpush1.msra.mxu0 0.0
      %1650 = vmatprep.subr.mxu0 0.0
      %1651 = vmatpush1.msra.mxu0 0.0
      %1652 = vmatprep.subr.mxu0 0.0
      %1653 = vmatpush1.msra.mxu0 0.0
      %1654 = vmatprep.subr.mxu0 0.0
      %1655 = vmatpush1.msra.mxu0 0.0
      %1656 = vmatprep.subr.mxu0 0.0
      %1657 = vmatpush1.msra.mxu0 0.0
      %1658 = vmatprep.subr.mxu0 0.0
      %1659 = vmatpush1.msra.mxu0 0.0
      %1660 = vmatprep.subr.mxu0 0.0
      %1661 = vmatpush1.msra.mxu0 0.0
      %1662 = vmatprep.subr.mxu0 0.0
      %1663 = vmatpush1.msra.mxu0 0.0
      %1664 = vmatprep.subr.mxu0 0.0
      %1665 = vmatpush1.msra.mxu0 0.0
      %1666 = vmatprep.subr.mxu0 0.0
      %1667 = vmatpush1.msra.mxu0 0.0
      %1668 = vmatprep.subr.mxu0 0.0
      %1669 = vmatpush1.msra.mxu0 0.0
      %1670 = vmatprep.subr.mxu0 0.0
      %1671 = vmatpush1.msra.mxu0 0.0
      %1672 = vmatprep.subr.mxu0 0.0
      %1673 = vmatpush1.msra.mxu0 0.0
      %1674 = vmatprep.subr.mxu0 0.0
      %1675 = vmatpush1.msra.mxu0 0.0
      %1676 = vmatprep.subr.mxu0 0.0
      %1677 = vmatpush1.msra.mxu0 0.0
      %1678 = vmatprep.subr.mxu0 0.0
      %1679 = vmatpush1.msra.mxu0 0.0
      %1680 = vmatprep.subr.mxu0 0.0
      %1681 = vmatpush1.msra.mxu0 0.0
      %1682 = vmatprep.subr.mxu0 0.0
      %1683 = vmatpush1.msra.mxu0 0.0
      %1684 = vmatprep.subr.mxu0 0.0
      %1685 = vmatpush1.msra.mxu0 0.0
      %1686 = vmatprep.subr.mxu0 0.0
      %1687 = vmatpush1.msra.mxu0 0.0
      %1688 = vmatprep.subr.mxu0 0.0
      %1689 = vmatpush1.msra.mxu0 0.0
      %1690 = vmatprep.subr.mxu0 0.0
      %1691 = vmatpush1.msra.mxu0 0.0
      %1692 = vmatprep.subr.mxu0 0.0
      %1693 = vmatpush1.msra.mxu0 0.0
      %1694 = vmatprep.mubr.f32.mxu0 0.0
      %1695 = vmatmul.mubr.f32.gmra.mrb[0].mxu0 %v1476
      %v1696 = vpop.f32.mrb[0].mxu0
      %v1697 = vadd.f32 %v1622, %v1696
      %v1698 = vpop.f32.mrb[0].mxu0
      %1699 = vmatprep.mubr.f32.mxu0 0.0
      %1700 = vmatmul.mubr.f32.gmra.mrb[0].mxu0 %v1478
      %v1701 = vpop.f32.mrb[0].mxu0
      %v1702 = vadd.f32 %v1627, %v1701
      %v1703 = vpop.f32.mrb[0].mxu0
      %1704 = vdwg.mxu0
      %v1705 = vsel %vm1475, %v1288, 0
      %v1707 = vsel %vm1475, %v1289, 0
      %1709 = vmatprep.subr.mxu0 0.0
      %1710 = vmatpush1.msra.mxu0 %v1291
      %1711 = vmatprep.subr.mxu0 0.0
      %1712 = vmatpush1.msra.mxu0 %v1292
      %1713 = vmatprep.subr.mxu0 0.0
      %1714 = vmatpush1.msra.mxu0 %v1293
      %1715 = vmatprep.subr.mxu0 0.0
      %1716 = vmatpush1.msra.mxu0 %v1294
      %1717 = vmatprep.subr.mxu0 0.0
      %1718 = vmatpush1.msra.mxu0 %v1295
      %1719 = vmatprep.subr.mxu0 0.0
      %1720 = vmatpush1.msra.mxu0 %v1296
      %1721 = vmatprep.subr.mxu0 0.0
      %1722 = vmatpush1.msra.mxu0 %v1297
      %1723 = vmatprep.subr.mxu0 0.0
      %1724 = vmatpush1.msra.mxu0 %v1298
      %1725 = vmatprep.subr.mxu0 0.0
      %1726 = vmatpush1.msra.mxu0 %v1299
      %1727 = vmatprep.subr.mxu0 0.0
      %1728 = vmatpush1.msra.mxu0 %v1300
      %1729 = vmatprep.subr.mxu0 0.0
      %1730 = vmatpush1.msra.mxu0 %v1301
      %1731 = vmatprep.subr.mxu0 0.0
      %1732 = vmatpush1.msra.mxu0 %v1302
      %1733 = vmatprep.subr.mxu0 0.0
      %1734 = vmatpush1.msra.mxu0 %v1303
      %1735 = vmatprep.subr.mxu0 0.0
      %1736 = vmatpush1.msra.mxu0 %v1304
      %1737 = vmatprep.subr.mxu0 0.0
      %1738 = vmatpush1.msra.mxu0 %v1305
      %1739 = vmatprep.subr.mxu0 0.0
      %1740 = vmatpush1.msra.mxu0 %v1306
      %1741 = vmatprep.subr.mxu0 0.0
      %1742 = vmatpush1.msra.mxu0 %v1307
      %1743 = vmatprep.subr.mxu0 0.0
      %1744 = vmatpush1.msra.mxu0 %v1308
      %1745 = vmatprep.subr.mxu0 0.0
      %1746 = vmatpush1.msra.mxu0 %v1309
      %1747 = vmatprep.subr.mxu0 0.0
      %1748 = vmatpush1.msra.mxu0 %v1310
      %1749 = vmatprep.subr.mxu0 0.0
      %1750 = vmatpush1.msra.mxu0 %v1311
      %1751 = vmatprep.subr.mxu0 0.0
      %1752 = vmatpush1.msra.mxu0 %v1312
      %1753 = vmatprep.subr.mxu0 0.0
      %1754 = vmatpush1.msra.mxu0 %v1313
      %1755 = vmatprep.subr.mxu0 0.0
      %1756 = vmatpush1.msra.mxu0 %v1314
      %1757 = vmatprep.subr.mxu0 0.0
      %1758 = vmatpush1.msra.mxu0 %v1315
      %1759 = vmatprep.subr.mxu0 0.0
      %1760 = vmatpush1.msra.mxu0 %v1316
      %1761 = vmatprep.subr.mxu0 0.0
      %1762 = vmatpush1.msra.mxu0 %v1317
      %1763 = vmatprep.subr.mxu0 0.0
      %1764 = vmatpush1.msra.mxu0 %v1318
      %1765 = vmatprep.subr.mxu0 0.0
      %1766 = vmatpush1.msra.mxu0 %v1319
      %1767 = vmatprep.subr.mxu0 0.0
      %1768 = vmatpush1.msra.mxu0 %v1320
      %1769 = vmatprep.subr.mxu0 0.0
      %1770 = vmatpush1.msra.mxu0 %v1321
      %1771 = vmatprep.subr.mxu0 0.0
      %1772 = vmatpush1.msra.mxu0 %v1322
      %1773 = vmatprep.mubr.f32.mxu0 %v1264
      %1774 = vmatmul.mubr.f32.gmra.mrb[0].mxu0 %v1285
      %v1775 = vpop.f32.mrb[0].mxu0
      %v1776 = vadd.f32 %v1697, %v1775
      %v1777 = vpop.f32.mrb[0].mxu0
      %1778 = vmatprep.mubr.f32.mxu0 %v1267
      %1779 = vmatmul.mubr.f32.gmra.mrb[0].mxu0 %v1286
      %v1780 = vpop.f32.mrb[0].mxu0
      %v1781 = vadd.f32 %v1702, %v1780
      %v1782 = vpop.f32.mrb[0].mxu0
      %1783 = vdwg.mxu0
      %1784 = vmatprep.subr.mxu0 0.0
      %1785 = vmatpush1.msra.mxu0 %v1323
      %1786 = vmatprep.subr.mxu0 0.0
      %1787 = vmatpush1.msra.mxu0 %v1324
      %1788 = vmatprep.subr.mxu0 0.0
      %1789 = vmatpush1.msra.mxu0 %v1325
      %1790 = vmatprep.subr.mxu0 0.0
      %1791 = vmatpush1.msra.mxu0 %v1326
      %1792 = vmatprep.subr.mxu0 0.0
      %1793 = vmatpush1.msra.mxu0 %v1327
      %1794 = vmatprep.subr.mxu0 0.0
      %1795 = vmatpush1.msra.mxu0 %v1328
      %1796 = vmatprep.subr.mxu0 0.0
      %1797 = vmatpush1.msra.mxu0 %v1329
      %1798 = vmatprep.subr.mxu0 0.0
      %1799 = vmatpush1.msra.mxu0 %v1330
      %1800 = vmatprep.subr.mxu0 0.0
      %1801 = vmatpush1.msra.mxu0 %v1331
      %1802 = vmatprep.subr.mxu0 0.0
      %1803 = vmatpush1.msra.mxu0 %v1332
      %1804 = vmatprep.subr.mxu0 0.0
      %1805 = vmatpush1.msra.mxu0 %v1333
      %1806 = vmatprep.subr.mxu0 0.0
      %1807 = vmatpush1.msra.mxu0 %v1334
      %1808 = vmatprep.subr.mxu0 0.0
      %1809 = vmatpush1.msra.mxu0 %v1335
      %1810 = vmatprep.subr.mxu0 0.0
      %1811 = vmatpush1.msra.mxu0 %v1336
      %1812 = vmatprep.subr.mxu0 0.0
      %1813 = vmatpush1.msra.mxu0 %v1337
      %1814 = vmatprep.subr.mxu0 0.0
      %1815 = vmatpush1.msra.mxu0 %v1338
      %1816 = vmatprep.subr.mxu0 0.0
      %1817 = vmatpush1.msra.mxu0 %v1339
      %1818 = vmatprep.subr.mxu0 0.0
      %1819 = vmatpush1.msra.mxu0 %v1340
      %1820 = vmatprep.subr.mxu0 0.0
      %1821 = vmatpush1.msra.mxu0 %v1341
      %1822 = vmatprep.subr.mxu0 0.0
      %1823 = vmatpush1.msra.mxu0 %v1342
      %1824 = vmatprep.subr.mxu0 0.0
      %1825 = vmatpush1.msra.mxu0 %v1343
      %1826 = vmatprep.subr.mxu0 0.0
      %1827 = vmatpush1.msra.mxu0 %v1344
      %1828 = vmatprep.subr.mxu0 0.0
      %1829 = vmatpush1.msra.mxu0 %v1345
      %1830 = vmatprep.subr.mxu0 0.0
      %1831 = vmatpush1.msra.mxu0 %v1346
      %1832 = vmatprep.subr.mxu0 0.0
      %1833 = vmatpush1.msra.mxu0 %v1347
      %1834 = vmatprep.subr.mxu0 0.0
      %1835 = vmatpush1.msra.mxu0 %v1348
      %1836 = vmatprep.subr.mxu0 0.0
      %1837 = vmatpush1.msra.mxu0 %v1349
      %1838 = vmatprep.subr.mxu0 0.0
      %1839 = vmatpush1.msra.mxu0 %v1350
      %1840 = vmatprep.subr.mxu0 0.0
      %1841 = vmatpush1.msra.mxu0 %v1351
      %1842 = vmatprep.subr.mxu0 0.0
      %1843 = vmatpush1.msra.mxu0 %v1352
      %1844 = vmatprep.subr.mxu0 0.0
      %1845 = vmatpush1.msra.mxu0 %v1353
      %1846 = vmatprep.subr.mxu0 0.0
      %1847 = vmatpush1.msra.mxu0 %v1354
      %1848 = vmatprep.mubr.f32.mxu0 %v1266
      %1849 = vmatmul.mubr.f32.gmra.mrb[0].mxu0 %v1265
      %v1850 = vpop.f32.mrb[0].mxu0
      %v1851 = vadd.f32 %v1776, %v1850
      %v1852 = vpop.f32.mrb[0].mxu0
      %1853 = vmatprep.mubr.f32.mxu0 %v1269
      %1854 = vmatmul.mubr.f32.gmra.mrb[0].mxu0 %v1268
      %v1855 = vpop.f32.mrb[0].mxu0
      %v1856 = vadd.f32 %v1781, %v1855
      %v1857 = vpop.f32.mrb[0].mxu0
      %1858 = vdwg.mxu0
      %1859 = vmatprep.subr.mxu0 0.0
      %1860 = vmatpush1.msra.mxu0 %v1355
      %1861 = vmatprep.subr.mxu0 0.0
      %1862 = vmatpush1.msra.mxu0 %v1356
      %1863 = vmatprep.subr.mxu0 0.0
      %1864 = vmatpush1.msra.mxu0 %v1357
      %1865 = vmatprep.subr.mxu0 0.0
      %1866 = vmatpush1.msra.mxu0 %v1358
      %1867 = vmatprep.subr.mxu0 0.0
      %1868 = vmatpush1.msra.mxu0 %v1359
      %1869 = vmatprep.subr.mxu0 0.0
      %1870 = vmatpush1.msra.mxu0 %v1360
      %1871 = vmatprep.subr.mxu0 0.0
      %1872 = vmatpush1.msra.mxu0 %v1361
      %1873 = vmatprep.subr.mxu0 0.0
      %1874 = vmatpush1.msra.mxu0 %v1362
      %1875 = vmatprep.subr.mxu0 0.0
      %1876 = vmatpush1.msra.mxu0 0.0
      %1877 = vmatprep.subr.mxu0 0.0
      %1878 = vmatpush1.msra.mxu0 0.0
      %1879 = vmatprep.subr.mxu0 0.0
      %1880 = vmatpush1.msra.mxu0 0.0
      %1881 = vmatprep.subr.mxu0 0.0
      %1882 = vmatpush1.msra.mxu0 0.0
      %1883 = vmatprep.subr.mxu0 0.0
      %1884 = vmatpush1.msra.mxu0 0.0
      %1885 = vmatprep.subr.mxu0 0.0
      %1886 = vmatpush1.msra.mxu0 0.0
      %1887 = vmatprep.subr.mxu0 0.0
      %1888 = vmatpush1.msra.mxu0 0.0
      %1889 = vmatprep.subr.mxu0 0.0
      %1890 = vmatpush1.msra.mxu0 0.0
      %1891 = vmatprep.subr.mxu0 0.0
      %1892 = vmatpush1.msra.mxu0 0.0
      %1893 = vmatprep.subr.mxu0 0.0
      %1894 = vmatpush1.msra.mxu0 0.0
      %1895 = vmatprep.subr.mxu0 0.0
      %1896 = vmatpush1.msra.mxu0 0.0
      %1897 = vmatprep.subr.mxu0 0.0
      %1898 = vmatpush1.msra.mxu0 0.0
      %1899 = vmatprep.subr.mxu0 0.0
      %1900 = vmatpush1.msra.mxu0 0.0
      %1901 = vmatprep.subr.mxu0 0.0
      %1902 = vmatpush1.msra.mxu0 0.0
      %1903 = vmatprep.subr.mxu0 0.0
      %1904 = vmatpush1.msra.mxu0 0.0
      %1905 = vmatprep.subr.mxu0 0.0
      %1906 = vmatpush1.msra.mxu0 0.0
      %1907 = vmatprep.subr.mxu0 0.0
      %1908 = vmatpush1.msra.mxu0 0.0
      %1909 = vmatprep.subr.mxu0 0.0
      %1910 = vmatpush1.msra.mxu0 0.0
      %1911 = vmatprep.subr.mxu0 0.0
      %1912 = vmatpush1.msra.mxu0 0.0
      %1913 = vmatprep.subr.mxu0 0.0
      %1914 = vmatpush1.msra.mxu0 0.0
      %1915 = vmatprep.subr.mxu0 0.0
      %1916 = vmatpush1.msra.mxu0 0.0
      %1917 = vmatprep.subr.mxu0 0.0
      %1918 = vmatpush1.msra.mxu0 0.0
      %1919 = vmatprep.subr.mxu0 0.0
      %1920 = vmatpush1.msra.mxu0 0.0
      %1921 = vmatprep.subr.mxu0 0.0
      %1922 = vmatpush1.msra.mxu0 0.0
      %1923 = vmatprep.mubr.f32.mxu0 0.0
      %1924 = vmatmul.mubr.f32.gmra.mrb[0].mxu0 %v1705
      %v1925 = vpop.f32.mrb[0].mxu0
      %v1926 = vadd.f32 %v1851, %v1925
      %v1927 = vpop.f32.mrb[0].mxu0
      %1928 = vmatprep.mubr.f32.mxu0 0.0
      %1929 = vmatmul.mubr.f32.gmra.mrb[0].mxu0 %v1707
      %v1930 = vpop.f32.mrb[0].mxu0
      %v1931 = vadd.f32 %v1856, %v1930
      %v1932 = vpop.f32.mrb[0].mxu0
      %1933 = vdwg.mxu0
      %s1934 = scalar_lea.vmem %s5, 1152
      %v1935 = vld [vmem:[%s1934] sm:$0xff]
      %v1936 = vld [vmem:[%s1934 + $0x8] sm:$0xff]
      %v1937 = vld [vmem:[%s1934 + $0x10] sm:$0xff]
      %v1938 = vld [vmem:[%s1934 + $0x18] sm:$0xff]
      %v1939 = vld [vmem:[%s1934 + $0x20] sm:$0xff]
      %v1940 = vld [vmem:[%s1934 + $0x28] sm:$0xff]
      %v1941 = vld [vmem:[%s1934 + $0x30] sm:$0xff]
      %v1942 = vld [vmem:[%s1934 + $0x38] sm:$0xff]
      %v1943 = vld [vmem:[%s1934 + $0x40] sm:$0xff]
      %v1944 = vld [vmem:[%s1934 + $0x48] sm:$0xff]
      %v1945 = vld [vmem:[%s1934 + $0x50] sm:$0xff]
      %v1946 = vld [vmem:[%s1934 + $0x58] sm:$0xff]
      %v1947 = vld [vmem:[%s1934 + $0x60] sm:$0xff]
      %v1948 = vld [vmem:[%s1934 + $0x68] sm:$0xff]
      %v1949 = vld [vmem:[%s1934 + $0x70] sm:$0xff]
      %v1950 = vld [vmem:[%s1934 + $0x78] sm:$0xff]
      %v1951 = vld [vmem:[%s1934 + $0x80] sm:$0xff]
      %v1952 = vld [vmem:[%s1934 + $0x88] sm:$0xff]
      %v1953 = vld [vmem:[%s1934 + $0x90] sm:$0xff]
      %v1954 = vld [vmem:[%s1934 + $0x98] sm:$0xff]
      %v1955 = vld [vmem:[%s1934 + $0xa0] sm:$0xff]
      %v1956 = vld [vmem:[%s1934 + $0xa8] sm:$0xff]
      %v1957 = vld [vmem:[%s1934 + $0xb0] sm:$0xff]
      %v1958 = vld [vmem:[%s1934 + $0xb8] sm:$0xff]
      %v1959 = vld [vmem:[%s1934 + $0xc0] sm:$0xff]
      %v1960 = vld [vmem:[%s1934 + $0xc8] sm:$0xff]
      %v1961 = vld [vmem:[%s1934 + $0xd0] sm:$0xff]
      %v1962 = vld [vmem:[%s1934 + $0xd8] sm:$0xff]
      %v1963 = vld [vmem:[%s1934 + $0xe0] sm:$0xff]
      %v1964 = vld [vmem:[%s1934 + $0xe8] sm:$0xff]
      %v1965 = vld [vmem:[%s1934 + $0xf0] sm:$0xff]
      %v1966 = vld [vmem:[%s1934 + $0xf8] sm:$0xff]
      %v1967 = vld [vmem:[%s1934 + $0x100] sm:$0xff]
      %v1968 = vld [vmem:[%s1934 + $0x108] sm:$0xff]
      %v1969 = vld [vmem:[%s1934 + $0x110] sm:$0xff]
      %v1970 = vld [vmem:[%s1934 + $0x118] sm:$0xff]
      %v1971 = vld [vmem:[%s1934 + $0x120] sm:$0xff]
      %v1972 = vld [vmem:[%s1934 + $0x128] sm:$0xff]
      %v1973 = vld [vmem:[%s1934 + $0x130] sm:$0xff]
      %v1974 = vld [vmem:[%s1934 + $0x138] sm:$0xff]
      %v1975 = vld [vmem:[%s1934 + $0x140] sm:$0xff]
      %v1976 = vld [vmem:[%s1934 + $0x148] sm:$0xff]
      %v1977 = vld [vmem:[%s1934 + $0x150] sm:$0xff]
      %v1978 = vld [vmem:[%s1934 + $0x158] sm:$0xff]
      %v1979 = vld [vmem:[%s1934 + $0x160] sm:$0xff]
      %v1980 = vld [vmem:[%s1934 + $0x168] sm:$0xff]
      %v1981 = vld [vmem:[%s1934 + $0x170] sm:$0xff]
      %v1982 = vld [vmem:[%s1934 + $0x178] sm:$0xff]
      %v1983 = vld [vmem:[%s1934 + $0x180] sm:$0xff]
      %v1984 = vld [vmem:[%s1934 + $0x188] sm:$0xff]
      %v1985 = vld [vmem:[%s1934 + $0x190] sm:$0xff]
      %v1986 = vld [vmem:[%s1934 + $0x198] sm:$0xff]
      %v1987 = vld [vmem:[%s1934 + $0x1a0] sm:$0xff]
      %v1988 = vld [vmem:[%s1934 + $0x1a8] sm:$0xff]
      %v1989 = vld [vmem:[%s1934 + $0x1b0] sm:$0xff]
      %v1990 = vld [vmem:[%s1934 + $0x1b8] sm:$0xff]
      %v1991 = vld [vmem:[%s1934 + $0x1c0] sm:$0xff]
      %v1992 = vld [vmem:[%s1934 + $0x1c8] sm:$0xff]
      %v1993 = vld [vmem:[%s1934 + $0x1d0] sm:$0xff]
      %v1994 = vld [vmem:[%s1934 + $0x1d8] sm:$0xff]
      %v1995 = vld [vmem:[%s1934 + $0x1e0] sm:$0xff]
      %v1996 = vld [vmem:[%s1934 + $0x1e8] sm:$0xff]
      %v1997 = vld [vmem:[%s1934 + $0x1f0] sm:$0xff]
      %v1998 = vld [vmem:[%s1934 + $0x1f8] sm:$0xff]
      %v1999 = vld [vmem:[%s1934 + $0x200] sm:$0xff]
      %v2000 = vld [vmem:[%s1934 + $0x208] sm:$0xff]
      %v2001 = vld [vmem:[%s1934 + $0x210] sm:$0xff]
      %v2002 = vld [vmem:[%s1934 + $0x218] sm:$0xff]
      %v2003 = vld [vmem:[%s1934 + $0x220] sm:$0xff]
      %v2004 = vld [vmem:[%s1934 + $0x228] sm:$0xff]
      %v2005 = vld [vmem:[%s1934 + $0x230] sm:$0xff]
      %v2006 = vld [vmem:[%s1934 + $0x238] sm:$0xff]
      %v2007 = vrot.slane %v1285, 2
      %v2008 = vrot.slane %v1286, 2
      %v2009 = vsel %vm959, %v2007, %v2008
      %v2010 = vrot.slane %v1264, 2
      %v2011 = vrot.slane %v1267, 2
      %v2012 = vsel %vm959, %v2010, %v2011
      %v2013 = vrot.slane %v1265, 2
      %v2014 = vrot.slane %v1268, 2
      %v2015 = vsel %vm959, %v2013, %v2014
      %v2016 = vrot.slane %v1266, 2
      %v2017 = vrot.slane %v1269, 2
      %v2018 = vsel %vm959, %v2016, %v2017
      %v2019 = vrot.slane %v1288, 2
      %v2020 = vrot.slane %v1289, 2
      %v2021 = vsel %vm959, %v2019, %v2020
      %v2022 = vrot.slane %v1287, 2
      %v2023 = vsel %vm959, %v2008, %v2022
      %v2024 = vrot.slane %v1270, 2
      %v2025 = vsel %vm959, %v2011, %v2024
      %v2026 = vrot.slane %v1271, 2
      %v2027 = vsel %vm959, %v2014, %v2026
      %v2028 = vrot.slane %v1272, 2
      %v2029 = vsel %vm959, %v2017, %v2028
      %v2030 = vrot.slane %v1290, 2
      %v2031 = vsel %vm959, %v2020, %v2030
      %v2040 = vsel %vm1475, %v2021, 0
      %v2042 = vsel %vm1475, %v2031, 0
      %2044 = vmatprep.subr.mxu0 0.0
      %2045 = vmatpush1.msra.mxu0 %v1935
      %2046 = vmatprep.subr.mxu0 0.0
      %2047 = vmatpush1.msra.mxu0 %v1936
      %2048 = vmatprep.subr.mxu0 0.0
      %2049 = vmatpush1.msra.mxu0 %v1937
      %2050 = vmatprep.subr.mxu0 0.0
      %2051 = vmatpush1.msra.mxu0 %v1938
      %2052 = vmatprep.subr.mxu0 0.0
      %2053 = vmatpush1.msra.mxu0 %v1939
      %2054 = vmatprep.subr.mxu0 0.0
      %2055 = vmatpush1.msra.mxu0 %v1940
      %2056 = vmatprep.subr.mxu0 0.0
      %2057 = vmatpush1.msra.mxu0 %v1941
      %2058 = vmatprep.subr.mxu0 0.0
      %2059 = vmatpush1.msra.mxu0 %v1942
      %2060 = vmatprep.subr.mxu0 0.0
      %2061 = vmatpush1.msra.mxu0 %v1943
      %2062 = vmatprep.subr.mxu0 0.0
      %2063 = vmatpush1.msra.mxu0 %v1944
      %2064 = vmatprep.subr.mxu0 0.0
      %2065 = vmatpush1.msra.mxu0 %v1945
      %2066 = vmatprep.subr.mxu0 0.0
      %2067 = vmatpush1.msra.mxu0 %v1946
      %2068 = vmatprep.subr.mxu0 0.0
      %2069 = vmatpush1.msra.mxu0 %v1947
      %2070 = vmatprep.subr.mxu0 0.0
      %2071 = vmatpush1.msra.mxu0 %v1948
      %2072 = vmatprep.subr.mxu0 0.0
      %2073 = vmatpush1.msra.mxu0 %v1949
      %2074 = vmatprep.subr.mxu0 0.0
      %2075 = vmatpush1.msra.mxu0 %v1950
      %2076 = vmatprep.subr.mxu0 0.0
      %2077 = vmatpush1.msra.mxu0 %v1951
      %2078 = vmatprep.subr.mxu0 0.0
      %2079 = vmatpush1.msra.mxu0 %v1952
      %2080 = vmatprep.subr.mxu0 0.0
      %2081 = vmatpush1.msra.mxu0 %v1953
      %2082 = vmatprep.subr.mxu0 0.0
      %2083 = vmatpush1.msra.mxu0 %v1954
      %2084 = vmatprep.subr.mxu0 0.0
      %2085 = vmatpush1.msra.mxu0 %v1955
      %2086 = vmatprep.subr.mxu0 0.0
      %2087 = vmatpush1.msra.mxu0 %v1956
      %2088 = vmatprep.subr.mxu0 0.0
      %2089 = vmatpush1.msra.mxu0 %v1957
      %2090 = vmatprep.subr.mxu0 0.0
      %2091 = vmatpush1.msra.mxu0 %v1958
      %2092 = vmatprep.subr.mxu0 0.0
      %2093 = vmatpush1.msra.mxu0 %v1959
      %2094 = vmatprep.subr.mxu0 0.0
      %2095 = vmatpush1.msra.mxu0 %v1960
      %2096 = vmatprep.subr.mxu0 0.0
      %2097 = vmatpush1.msra.mxu0 %v1961
      %2098 = vmatprep.subr.mxu0 0.0
      %2099 = vmatpush1.msra.mxu0 %v1962
      %2100 = vmatprep.subr.mxu0 0.0
      %2101 = vmatpush1.msra.mxu0 %v1963
      %2102 = vmatprep.subr.mxu0 0.0
      %2103 = vmatpush1.msra.mxu0 %v1964
      %2104 = vmatprep.subr.mxu0 0.0
      %2105 = vmatpush1.msra.mxu0 %v1965
      %2106 = vmatprep.subr.mxu0 0.0
      %2107 = vmatpush1.msra.mxu0 %v1966
      %2108 = vmatprep.mubr.f32.mxu0 %v2012
      %2109 = vmatmul.mubr.f32.gmra.mrb[0].mxu0 %v2009
      %v2110 = vpop.f32.mrb[0].mxu0
      %v2111 = vadd.f32 0.0, %v2110
      %v2112 = vpop.f32.mrb[0].mxu0
      %2113 = vmatprep.mubr.f32.mxu0 %v2025
      %2114 = vmatmul.mubr.f32.gmra.mrb[0].mxu0 %v2023
      %v2115 = vpop.f32.mrb[0].mxu0
      %v2116 = vadd.f32 0.0, %v2115
      %v2117 = vpop.f32.mrb[0].mxu0
      %2118 = vdwg.mxu0
      %2119 = vmatprep.subr.mxu0 0.0
      %2120 = vmatpush1.msra.mxu0 %v1967
      %2121 = vmatprep.subr.mxu0 0.0
      %2122 = vmatpush1.msra.mxu0 %v1968
      %2123 = vmatprep.subr.mxu0 0.0
      %2124 = vmatpush1.msra.mxu0 %v1969
      %2125 = vmatprep.subr.mxu0 0.0
      %2126 = vmatpush1.msra.mxu0 %v1970
      %2127 = vmatprep.subr.mxu0 0.0
      %2128 = vmatpush1.msra.mxu0 %v1971
      %2129 = vmatprep.subr.mxu0 0.0
      %2130 = vmatpush1.msra.mxu0 %v1972
      %2131 = vmatprep.subr.mxu0 0.0
      %2132 = vmatpush1.msra.mxu0 %v1973
      %2133 = vmatprep.subr.mxu0 0.0
      %2134 = vmatpush1.msra.mxu0 %v1974
      %2135 = vmatprep.subr.mxu0 0.0
      %2136 = vmatpush1.msra.mxu0 %v1975
      %2137 = vmatprep.subr.mxu0 0.0
      %2138 = vmatpush1.msra.mxu0 %v1976
      %2139 = vmatprep.subr.mxu0 0.0
      %2140 = vmatpush1.msra.mxu0 %v1977
      %2141 = vmatprep.subr.mxu0 0.0
      %2142 = vmatpush1.msra.mxu0 %v1978
      %2143 = vmatprep.subr.mxu0 0.0
      %2144 = vmatpush1.msra.mxu0 %v1979
      %2145 = vmatprep.subr.mxu0 0.0
      %2146 = vmatpush1.msra.mxu0 %v1980
      %2147 = vmatprep.subr.mxu0 0.0
      %2148 = vmatpush1.msra.mxu0 %v1981
      %2149 = vmatprep.subr.mxu0 0.0
      %2150 = vmatpush1.msra.mxu0 %v1982
      %2151 = vmatprep.subr.mxu0 0.0
      %2152 = vmatpush1.msra.mxu0 %v1983
      %2153 = vmatprep.subr.mxu0 0.0
      %2154 = vmatpush1.msra.mxu0 %v1984
      %2155 = vmatprep.subr.mxu0 0.0
      %2156 = vmatpush1.msra.mxu0 %v1985
      %2157 = vmatprep.subr.mxu0 0.0
      %2158 = vmatpush1.msra.mxu0 %v1986
      %2159 = vmatprep.subr.mxu0 0.0
      %2160 = vmatpush1.msra.mxu0 %v1987
      %2161 = vmatprep.subr.mxu0 0.0
      %2162 = vmatpush1.msra.mxu0 %v1988
      %2163 = vmatprep.subr.mxu0 0.0
      %2164 = vmatpush1.msra.mxu0 %v1989
      %2165 = vmatprep.subr.mxu0 0.0
      %2166 = vmatpush1.msra.mxu0 %v1990
      %2167 = vmatprep.subr.mxu0 0.0
      %2168 = vmatpush1.msra.mxu0 %v1991
      %2169 = vmatprep.subr.mxu0 0.0
      %2170 = vmatpush1.msra.mxu0 %v1992
      %2171 = vmatprep.subr.mxu0 0.0
      %2172 = vmatpush1.msra.mxu0 %v1993
      %2173 = vmatprep.subr.mxu0 0.0
      %2174 = vmatpush1.msra.mxu0 %v1994
      %2175 = vmatprep.subr.mxu0 0.0
      %2176 = vmatpush1.msra.mxu0 %v1995
      %2177 = vmatprep.subr.mxu0 0.0
      %2178 = vmatpush1.msra.mxu0 %v1996
      %2179 = vmatprep.subr.mxu0 0.0
      %2180 = vmatpush1.msra.mxu0 %v1997
      %2181 = vmatprep.subr.mxu0 0.0
      %2182 = vmatpush1.msra.mxu0 %v1998
      %2183 = vmatprep.mubr.f32.mxu0 %v2018
      %2184 = vmatmul.mubr.f32.gmra.mrb[0].mxu0 %v2015
      %v2185 = vpop.f32.mrb[0].mxu0
      %v2186 = vadd.f32 %v2111, %v2185
      %v2187 = vpop.f32.mrb[0].mxu0
      %2188 = vmatprep.mubr.f32.mxu0 %v2029
      %2189 = vmatmul.mubr.f32.gmra.mrb[0].mxu0 %v2027
      %v2190 = vpop.f32.mrb[0].mxu0
      %v2191 = vadd.f32 %v2116, %v2190
      %v2192 = vpop.f32.mrb[0].mxu0
      %2193 = vdwg.mxu0
      %2194 = vmatprep.subr.mxu0 0.0
      %2195 = vmatpush1.msra.mxu0 %v1999
      %2196 = vmatprep.subr.mxu0 0.0
      %2197 = vmatpush1.msra.mxu0 %v2000
      %2198 = vmatprep.subr.mxu0 0.0
      %2199 = vmatpush1.msra.mxu0 %v2001
      %2200 = vmatprep.subr.mxu0 0.0
      %2201 = vmatpush1.msra.mxu0 %v2002
      %2202 = vmatprep.subr.mxu0 0.0
      %2203 = vmatpush1.msra.mxu0 %v2003
      %2204 = vmatprep.subr.mxu0 0.0
      %2205 = vmatpush1.msra.mxu0 %v2004
      %2206 = vmatprep.subr.mxu0 0.0
      %2207 = vmatpush1.msra.mxu0 %v2005
      %2208 = vmatprep.subr.mxu0 0.0
      %2209 = vmatpush1.msra.mxu0 %v2006
      %2210 = vmatprep.subr.mxu0 0.0
      %2211 = vmatpush1.msra.mxu0 0.0
      %2212 = vmatprep.subr.mxu0 0.0
      %2213 = vmatpush1.msra.mxu0 0.0
      %2214 = vmatprep.subr.mxu0 0.0
      %2215 = vmatpush1.msra.mxu0 0.0
      %2216 = vmatprep.subr.mxu0 0.0
      %2217 = vmatpush1.msra.mxu0 0.0
      %2218 = vmatprep.subr.mxu0 0.0
      %2219 = vmatpush1.msra.mxu0 0.0
      %2220 = vmatprep.subr.mxu0 0.0
      %2221 = vmatpush1.msra.mxu0 0.0
      %2222 = vmatprep.subr.mxu0 0.0
      %2223 = vmatpush1.msra.mxu0 0.0
      %2224 = vmatprep.subr.mxu0 0.0
      %2225 = vmatpush1.msra.mxu0 0.0
      %2226 = vmatprep.subr.mxu0 0.0
      %2227 = vmatpush1.msra.mxu0 0.0
      %2228 = vmatprep.subr.mxu0 0.0
      %2229 = vmatpush1.msra.mxu0 0.0
      %2230 = vmatprep.subr.mxu0 0.0
      %2231 = vmatpush1.msra.mxu0 0.0
      %2232 = vmatprep.subr.mxu0 0.0
      %2233 = vmatpush1.msra.mxu0 0.0
      %2234 = vmatprep.subr.mxu0 0.0
      %2235 = vmatpush1.msra.mxu0 0.0
      %2236 = vmatprep.subr.mxu0 0.0
      %2237 = vmatpush1.msra.mxu0 0.0
      %2238 = vmatprep.subr.mxu0 0.0
      %2239 = vmatpush1.msra.mxu0 0.0
      %2240 = vmatprep.subr.mxu0 0.0
      %2241 = vmatpush1.msra.mxu0 0.0
      %2242 = vmatprep.subr.mxu0 0.0
      %2243 = vmatpush1.msra.mxu0 0.0
      %2244 = vmatprep.subr.mxu0 0.0
      %2245 = vmatpush1.msra.mxu0 0.0
      %2246 = vmatprep.subr.mxu0 0.0
      %2247 = vmatpush1.msra.mxu0 0.0
      %2248 = vmatprep.subr.mxu0 0.0
      %2249 = vmatpush1.msra.mxu0 0.0
      %2250 = vmatprep.subr.mxu0 0.0
      %2251 = vmatpush1.msra.mxu0 0.0
      %2252 = vmatprep.subr.mxu0 0.0
      %2253 = vmatpush1.msra.mxu0 0.0
      %2254 = vmatprep.subr.mxu0 0.0
      %2255 = vmatpush1.msra.mxu0 0.0
      %2256 = vmatprep.subr.mxu0 0.0
      %2257 = vmatpush1.msra.mxu0 0.0
      %2258 = vmatprep.mubr.f32.mxu0 0.0
      %2259 = vmatmul.mubr.f32.gmra.mrb[0].mxu0 %v2040
      %v2260 = vpop.f32.mrb[0].mxu0
      %v2261 = vadd.f32 %v2186, %v2260
      %v2262 = vpop.f32.mrb[0].mxu0
      %2263 = vmatprep.mubr.f32.mxu0 0.0
      %2264 = vmatmul.mubr.f32.gmra.mrb[0].mxu0 %v2042
      %v2265 = vpop.f32.mrb[0].mxu0
      %v2266 = vadd.f32 %v2191, %v2265
      %v2267 = vpop.f32.mrb[0].mxu0
      %2268 = vdwg.mxu0
      %v2269 = vadd.f32 %v1926, %v2261
      %v2270 = vadd.f32 %v1931, %v2266
      %v2271 = vld [vmem:[#allocation2] sm:$0x1]
      %v2273 = vlaneseq
      %v2274 = vshrl.u32 %v2273, 7
      %v2275 = vsub.s32 0, %v2274
      %v2276 = vrot.slane %v2271, %v2275
      %2277 = vset.pattern.permute.xlu0 0
      %2278 = vperm.xlu0 %2277, %v2276
      %v2279 = vpop.permute.xlu0 %2278
      %v2281 = vadd.f32 %v2269, %v2279
      %v2282 = vadd.f32 %v2270, %v2279
      %v2283 = vxor.u32 %v2281, 2147483648
      %v2284 = vxor.u32 %v2282, 2147483648
      %v2285 = vmul.f32 %v2283, 1.442695
      %v2286 = vpow.pop %v2285
      %v2287 = vmul.f32 %v2284, 1.442695
      %v2288 = vpow.pop %v2287
      %v2289 = vadd.f32 %v2286, 1.0
      %v2290 = vadd.f32 %v2288, 1.0
      %v2291 = vrcp.pop %v2289
      %v2292 = vmul.f32 1.0, %v2291
      %v2293 = vrcp.pop %v2290
      %v2294 = vmul.f32 1.0, %v2293
      %v2296 = vrot.slane %v2292, 1
      %2297 = vrot.lane.b32.xlu0 %v2296, 16
      %v2298 = vpop.permute.xlu0 %2297
      %v2300 = vrot.slane %v2292, 2
      %2301 = vrot.lane.b32.xlu0 %v2300, 32
      %v2302 = vpop.permute.xlu0 %2301
      %v2304 = vrot.slane %v2292, 3
      %2305 = vrot.lane.b32.xlu0 %v2304, 48
      %v2306 = vpop.permute.xlu0 %2305
      %v2308 = vrot.slane %v2292, 4
      %2309 = vrot.lane.b32.xlu0 %v2308, 64
      %v2310 = vpop.permute.xlu0 %2309
      %v2312 = vrot.slane %v2292, 5
      %2313 = vrot.lane.b32.xlu0 %v2312, 80
      %v2314 = vpop.permute.xlu0 %2313
      %v2316 = vrot.slane %v2292, 6
      %2317 = vrot.lane.b32.xlu0 %v2316, 96
      %v2318 = vpop.permute.xlu0 %2317
      %v2320 = vrot.slane %v2292, 7
      %2321 = vrot.lane.b32.xlu0 %v2320, 112
      %v2322 = vpop.permute.xlu0 %2321
      %v2325 = vrot.slane %v2294, 1
      %2326 = vrot.lane.b32.xlu0 %v2325, 16
      %v2327 = vpop.permute.xlu0 %2326
      %v2329 = vrot.slane %v2294, 2
      %2330 = vrot.lane.b32.xlu0 %v2329, 32
      %v2331 = vpop.permute.xlu0 %2330
      %v2333 = vrot.slane %v2294, 3
      %2334 = vrot.lane.b32.xlu0 %v2333, 48
      %v2335 = vpop.permute.xlu0 %2334
      %v2337 = vrot.slane %v2294, 4
      %2338 = vrot.lane.b32.xlu0 %v2337, 64
      %v2339 = vpop.permute.xlu0 %2338
      %v2341 = vrot.slane %v2294, 5
      %2342 = vrot.lane.b32.xlu0 %v2341, 80
      %v2343 = vpop.permute.xlu0 %2342
      %v2345 = vrot.slane %v2294, 6
      %2346 = vrot.lane.b32.xlu0 %v2345, 96
      %v2347 = vpop.permute.xlu0 %2346
      %v2349 = vrot.slane %v2294, 7
      %2350 = vrot.lane.b32.xlu0 %v2349, 112
      %v2351 = vpop.permute.xlu0 %2350
      %vm2353 = vcmask 130048
      %v2354 = vsel %vm2353, %v2292, %v2298
      %v2355 = vsel %vm1263, %v2354, %v2302
      %vm2356 = vcmask 392192
      %v2357 = vsel %vm2356, %v2355, %v2306
      %v2358 = vsel %vm1475, %v2357, %v2310
      %vm2359 = vcmask 654336
      %v2360 = vsel %vm2359, %v2358, %v2314
      %vm2361 = vcmask 785408
      %v2362 = vsel %vm2361, %v2360, %v2318
      %vm2363 = vcmask 916480
      %v2364 = vsel %vm2363, %v2362, %v2322
      %v2365 = vsel %vm2353, %v2294, %v2327
      %v2366 = vsel %vm1263, %v2365, %v2331
      %v2367 = vsel %vm2356, %v2366, %v2335
      %v2368 = vsel %vm1475, %v2367, %v2339
      %v2369 = vsel %vm2359, %v2368, %v2343
      %v2370 = vsel %vm2361, %v2369, %v2347
      %v2371 = vsel %vm2363, %v2370, %v2351
      %v2374 = vcombine.low %v2364, %v2371
      %v2376 = vunpack.c.l.s4 1966171168
      %v2377 = vunpack.c.0.s8 %v2376
      %v2378 = vlaneseq
      %v2379 = vshrl.u32 %v2378, 7
      %v2380 = vsub.s32 %v2377, %v2379
      %v2381 = vrot.slane %v2374, %v2380
      %v2383 = vunpack.c.l.s4 1966171168
      %v2384 = vunpack.c.0.s8 %v2383
      %v2385 = vlaneseq
      %v2386 = vshrl.u32 %v2385, 7
      %v2387 = vsub.s32 %v2384, %v2386
      %v2388 = vrot.slane %v2381, %v2387
      %v2390 = vlaneseq
      %vm2391 = vcmp.ge.s32.totalorder %v2390, 0
      %vm2392 = vcmp.lt.s32.totalorder %v2390, 256
      %vm2393 = vmand %vm2391, %vm2392
      %2394 = vst.msk [vmem:[%s424] sm:$0x3] %vm2393, %v2388
      %s2395 = sadd.s32 %s24, %s25
      %p2396 = scmp.lt.s32.totalorder %s2395, 1
      %s2397 = scalar_select %p2396, %s2395, 1
      %s2398 = smul.addr %s2397, 2
      %s2399 = scalar_lea.vmem %s7, %s2398
      // Predicated region
      $region49: #{gan_model_forward.1} parent=47 // pred_check
        %p2400 = pneg %p232
      $region50: #{gan_model_forward.1} parent=47 // pred_check_branch
        %2402 = sbr.rel (%p2400) target = $region52
      $region51: #{gan_model_forward.1} parent=47 // pred_region
        %s2403 = sadd.s32 %s24, %s25
      $region52: #{gan_model_forward.1} parent=47 // pred_fallthru
        _
    $region48: #{gan_model_forward.1} parent=5 // pred_fallthru
      _
    %p2404 = scmp.le.s32.totalorder 2, %s15
    // Predicated region
    $region53: #{gan_model_forward.1} parent=5 // pred_check
      %p2405 = pneg %p2404
    $region54: #{gan_model_forward.1} parent=5 // pred_check_branch
      %2407 = sbr.rel (%p2405) target = $region56
    $region55: #{gan_model_forward.1} parent=5 // pred_region
      %s2408 = ssub.s32 %s15, 2
      // Predicated region
      $region57: #{gan_model_forward.1} parent=55 // pred_check
        %p2409 = pneg %p238
      $region58: #{gan_model_forward.1} parent=55 // pred_check_branch
        %2411 = sbr.rel (%p2409) target = $region60
      $region59: #{gan_model_forward.1} parent=55 // pred_region
        %s2412 = sadd.s32 %s26, %s27
        %p2413 = scmp.lt.s32.totalorder %s2412, 1
        %s2414 = scalar_select %p2413, %s2412, 1
        %s2415 = smul.addr %s2414, 2
        %s2416 = scalar_lea.vmem %s7, %s2415
      $region60: #{gan_model_forward.1} parent=55 // pred_fallthru
        _
    $region56: #{gan_model_forward.1} parent=5 // pred_fallthru
      _
  $region6: #{gan_model_forward.1} parent=0 // loop_footer
    %s19 = sadd.s32 1, %s15
  $region7: #{gan_model_forward.1} parent=0 // loop_footer_branch
    %14 = sbr.rel target = $region3
  $region8: #{gan_model_forward.1} parent=0 // loop_exit
    _

</llo_original>
